<compile_context>
chip_gen: v7x
topology: tpu7x:2x2x1
jax: 0.10.0
libtpu: 0.0.40
codegen_flags: <defaults>
</compile_context>

<pallas_src>
import jax
import jax.numpy as jnp
from jax import lax
from jax.experimental import pallas as pl
from jax.experimental.pallas import tpu as pltpu


# --------------------------------- kernel -----------------------------------

def bigru_kernel(len_ref, pf_ref, pb_ref,
                 whh_f_ref, whh_b_ref, bhn_f_ref, bhn_b_ref,
                 hf_out_ref, hb_out_ref,
                 hf_sc, hb_sc):
    """Processes one chunk of Tk timesteps for both directions.

    len_ref  : (B, 1) int32   sequence lengths (loaded once)
    pf_ref   : (Tk, B, 3H)    forward pre-activations  x@W_ih + b_ih (+b_hh for r,z)
    pb_ref   : (Tk, B, 3H)    backward pre-activations (same array layout)
    whh_*_ref: (H, 3H)        fused recurrent weights (gate order r|z|n)
    bhn_*_ref: (1, H)         recurrent bias of the n gate (must stay inside r*(...))
    hf/hb_out: (B, H) f32     final hidden states (written at the last grid step)
    hf/hb_sc : (B, H) f32     running hidden states (VMEM scratch)
    """
    t = pl.program_id(0)
    n_chunks = pl.num_programs(0)
    Tk = pf_ref.shape[0]
    H = whh_f_ref.shape[0]

    @pl.when(t == 0)
    def _():
        hf_sc[...] = jnp.zeros_like(hf_sc)
        hb_sc[...] = jnp.zeros_like(hb_sc)

    lengths = len_ref[...]          # (B, 1) int32
    whh_f = whh_f_ref[...]          # (H, 3H), compute dtype
    whh_b = whh_b_ref[...]
    bhn_f = bhn_f_ref[...]          # (1, H) f32
    bhn_b = bhn_b_ref[...]

    t0_f = t * Tk                       # first global timestep of forward chunk
    t0_b = (n_chunks - 1 - t) * Tk      # first global timestep of backward chunk

    def gru_step(px, h, whh, bhn):
        # PyTorch GRU cell (gate order r, z, n); px already contains
        # x@W_ih + b_ih (and b_hh for r,z).  Single fused recurrent matmul.
        gh = jnp.dot(h.astype(whh.dtype), whh,
                     preferred_element_type=jnp.float32)          # (B, 3H)
        r = jax.nn.sigmoid(px[:, :H] + gh[:, :H])
        z = jax.nn.sigmoid(px[:, H:2 * H] + gh[:, H:2 * H])
        n = jnp.tanh(px[:, 2 * H:] + r * (gh[:, 2 * H:] + bhn))
        return (1.0 - z) * n + z * h

    def body(j, carry):
        hf, hb = carry
        kf = j                      # forward sub-step (ascending global time)
        kb = Tk - 1 - j             # backward sub-step (descending global time)
        # Masked update == pack_padded_sequence skipping padded steps
        # (valid only for left-aligned masks).
        mf = (lengths > (t0_f + kf)).astype(jnp.float32)          # (B, 1)
        mb = (lengths > (t0_b + kb)).astype(jnp.float32)

        hf_new = gru_step(pf_ref[kf], hf, whh_f, bhn_f)
        hb_new = gru_step(pb_ref[kb], hb, whh_b, bhn_b)

        hf = mf * hf_new + (1.0 - mf) * hf
        hb = mb * hb_new + (1.0 - mb) * hb
        return hf, hb

    hf, hb = lax.fori_loop(0, Tk, body, (hf_sc[...], hb_sc[...]), unroll=True)
    hf_sc[...] = hf
    hb_sc[...] = hb

    @pl.when(t == n_chunks - 1)
    def _():
        hf_out_ref[...] = hf
        hb_out_ref[...] = hb


# --------------------------------- wrapper ----------------------------------

def bigru_pallas(hidden_states, attention_mask, params, *, block_t=16,
                 compute_dtype=jnp.float32):
    """hidden_states: (B, T, H) (batch-first, like the torch module).
       attention_mask: (B, T) {0,1} with contiguous (left-aligned) valid tokens."""
    B, T, H = hidden_states.shape
    x = hidden_states.astype(jnp.float32)
    lengths = attention_mask.astype(jnp.int32).sum(axis=1)              # (B,)

    # Pad batch to a sublane multiple (>=8) and time to a multiple of the chunk.
    B_pad = max(8, -(-B // 8) * 8)
    Tk = max(1, min(block_t, T))
    T_pad = -(-T // Tk) * Tk
    n_chunks = T_pad // Tk

    x = jnp.pad(x, ((0, B_pad - B), (0, T_pad - T), (0, 0)))
    lengths = jnp.pad(lengths, (0, B_pad - B)).reshape(B_pad, 1)        # pad rows: len=0
    x_tm = jnp.transpose(x, (1, 0, 2))                                  # (T_pad, B_pad, H)

    # Hoisted input projection: one big matmul over all timesteps (plain XLA).
    # r/z biases (b_ih + b_hh) are folded in; the n gate only gets b_in here
    # (b_hn must stay inside r * (h@W_hn + b_hn) in the kernel).
    def input_preacts(wih, bih, bhh):
        gi = jnp.einsum("tbh,hg->tbg",
                        x_tm.astype(compute_dtype), wih.astype(compute_dtype),
                        preferred_element_type=jnp.float32)
        b_fold = bih + jnp.concatenate(
            [bhh[:, :2 * H], jnp.zeros((1, H), jnp.float32)], axis=1)
        return gi + b_fold                                              # (T_pad, B_pad, 3H)

    pf = input_preacts(params["wih_f"], params["bih_f"], params["bhh_f"])
    pb = input_preacts(params["wih_b"], params["bih_b"], params["bhh_b"])

    whh_f = params["whh_f"].astype(compute_dtype)
    whh_b = params["whh_b"].astype(compute_dtype)
    bhn_f = params["bhh_f"][:, 2 * H:]
    bhn_b = params["bhh_b"][:, 2 * H:]

    def const_spec(shape):
        # Constant-index operands stay resident: single-buffer them to halve VMEM.
        kwargs = {}
        if hasattr(pl, "Buffered"):
            kwargs["pipeline_mode"] = pl.Buffered(1)
        return pl.BlockSpec(shape, lambda t: (0,) * len(shape), **kwargs)

    grid_spec = pltpu.PrefetchScalarGridSpec(
        num_scalar_prefetch=0,
        grid=(n_chunks,),
        in_specs=[
            const_spec((B_pad, 1)),                                       # lengths
            pl.BlockSpec((Tk, B_pad, 3 * H), lambda t: (t, 0, 0)),        # fwd preacts
            pl.BlockSpec((Tk, B_pad, 3 * H),
                         lambda t: (n_chunks - 1 - t, 0, 0)),             # bwd preacts
            const_spec((H, 3 * H)),                                       # whh_f
            const_spec((H, 3 * H)),                                       # whh_b
            const_spec((1, H)),                                           # bhn_f
            const_spec((1, H)),                                           # bhn_b
        ],
        out_specs=(
            pl.BlockSpec((B_pad, H), lambda t: (0, 0)),                   # h_forward
            pl.BlockSpec((B_pad, H), lambda t: (0, 0)),                   # h_backward
        ),
        scratch_shapes=[pltpu.VMEM((B_pad, H), jnp.float32),
                        pltpu.VMEM((B_pad, H), jnp.float32)],
    )

    hf, hb = pl.pallas_call(
        bigru_kernel,
        out_shape=(jax.ShapeDtypeStruct((B_pad, H), jnp.float32),
                   jax.ShapeDtypeStruct((B_pad, H), jnp.float32)),
        grid_spec=grid_spec,
        compiler_params=pltpu.CompilerParams(
            dimension_semantics=("arbitrary",),          # time axis is serial
            vmem_limit_bytes=64 * 1024 * 1024),
    )(lengths, pf, pb, whh_f, whh_b, bhn_f, bhn_b)

    # Classifier (N=1 matmul) done once in the wrapper: worst-case MXU shape,
    # cheaper and simpler outside the kernel.
    hf = hf[:B]
    hb = hb[:B]
    return jnp.concatenate([hf, hb], axis=1) @ params["wc"] + params["bc"]


# ---------------- pure-JAX reference (same math, batch-first) ----------------

def bigru_ref(hidden_states, attention_mask, p):
    B, T, H = hidden_states.shape
    x = hidden_states.astype(jnp.float32)
    m = attention_mask.astype(jnp.float32)[:, :, None]                  # (B, T, 1)

    def cell(xt, h, wih, whh, bih, bhh):
        gi = xt @ wih + bih
        gh = h @ whh + bhh
        r = jax.nn.sigmoid(gi[:, :H] + gh[:, :H])
        z = jax.nn.sigmoid(gi[:, H:2 * H] + gh[:, H:2 * H])
        n = jnp.tanh(gi[:, 2 * H:] + r * gh[:, 2 * H:])
        return (1.0 - z) * n + z * h

    hf = jnp.zeros((B, H), jnp.float32)
    for t in range(T):
        hn = cell(x[:, t], hf, p["wih_f"], p["whh_f"], p["bih_f"], p["bhh_f"])
        hf = m[:, t] * hn + (1.0 - m[:, t]) * hf

    hb = jnp.zeros((B, H), jnp.float32)
    for t in reversed(range(T)):
        hn = cell(x[:, t], hb, p["wih_b"], p["whh_b"], p["bih_b"], p["bhh_b"])
        hb = m[:, t] * hn + (1.0 - m[:, t]) * hb

    return jnp.concatenate([hf, hb], axis=1) @ p["wc"] + p["bc"]


# ---------------- deterministic parameter init (shapes from __init__) --------

def init_params(key, hidden_size):
    H = hidden_size
    keys = jax.random.split(key, 10)
    bg = 1.0 / jnp.sqrt(H)          # GRU params ~ U(-1/sqrt(H), 1/sqrt(H))
    bc = 1.0 / jnp.sqrt(2.0 * H)    # classifier Linear(2H, 1)

    def u(k, shape, b):
        return jax.random.uniform(k, shape, jnp.float32, -b, b)

    return {
        # weights stored transposed (in_dim, out_dim), gates concatenated r|z|n
        "wih_f": u(keys[0], (H, 3 * H), bg), "whh_f": u(keys[1], (H, 3 * H), bg),
        "bih_f": u(keys[2], (1, 3 * H), bg), "bhh_f": u(keys[3], (1, 3 * H), bg),
        "wih_b": u(keys[4], (H, 3 * H), bg), "whh_b": u(keys[5], (H, 3 * H), bg),
        "bih_b": u(keys[6], (1, 3 * H), bg), "bhh_b": u(keys[7], (1, 3 * H), bg),
        "wc": u(keys[8], (2 * H, 1), bc),
        "bc": u(keys[9], (1,), bc),
    }


if __name__ == "__main__":
    B, T, H = 2, 8, 128
    key = jax.random.PRNGKey(0)
    k_param, k_x = jax.random.split(key)

    params = init_params(k_param, H)
    hidden_states = jax.random.normal(k_x, (B, T, H), jnp.float32)
    lengths = jnp.array([8, 5], jnp.int32)                              # contiguous valid prefix
    attention_mask = (jnp.arange(T)[None, :] < lengths[:, None]).astype(jnp.int32)

    ref = bigru_ref(hidden_states, attention_mask, params)

    # f32 path (exact)
    out = bigru_pallas(hidden_states, attention_mask, params, block_t=4)
    out = jax.block_until_ready(out)
    assert out.shape == (B, 1)
    assert jnp.allclose(out, ref, rtol=1e-4, atol=1e-4), (out, ref)

    # bf16-matmul path (hidden state / gates stay f32) — looser tolerance
    out_bf16 = bigru_pallas(hidden_states, attention_mask, params, block_t=4,
                            compute_dtype=jnp.bfloat16)
    out_bf16 = jax.block_until_ready(out_bf16)
    assert jnp.allclose(out_bf16, ref, rtol=5e-2, atol=5e-2), (out_bf16, ref)

    print("KERNEL_OK")
</pallas_src>

<mosaic_0001>
module attributes {stable_mosaic.version = 11 : i64} {
  func.func @bigru_kernel(%arg0: i32, %arg1: memref<8x1xi32, #tpu.memory_space<vmem>>, %arg2: memref<4x8x384xf32, #tpu.memory_space<vmem>>, %arg3: memref<4x8x384xf32, #tpu.memory_space<vmem>>, %arg4: memref<128x384xf32, #tpu.memory_space<vmem>>, %arg5: memref<128x384xf32, #tpu.memory_space<vmem>>, %arg6: memref<1x128xf32, #tpu.memory_space<vmem>>, %arg7: memref<1x128xf32, #tpu.memory_space<vmem>>, %arg8: memref<8x128xf32, #tpu.memory_space<vmem>>, %arg9: memref<8x128xf32, #tpu.memory_space<vmem>>, %arg10: memref<8x128xf32, #tpu.memory_space<vmem>>, %arg11: memref<8x128xf32, #tpu.memory_space<vmem>>) attributes {dimension_semantics = [#tpu.dimension_semantics<arbitrary>], iteration_bounds = array<i64: 2>, scalar_prefetch = 0 : i64, scratch_operands = 2 : i64, tpu.core_type = #tpu.core_type<tc>, window_params = [{pipeline_mode = #tpu.pipeline_mode<synchronous>, transform_indices = @transform_0, window_bounds = array<i64: 8, 1>}, {transform_indices = @transform_1, window_bounds = array<i64: 4, 8, 384>}, {transform_indices = @transform_2, window_bounds = array<i64: 4, 8, 384>}, {pipeline_mode = #tpu.pipeline_mode<synchronous>, transform_indices = @transform_3, window_bounds = array<i64: 128, 384>}, {pipeline_mode = #tpu.pipeline_mode<synchronous>, transform_indices = @transform_4, window_bounds = array<i64: 128, 384>}, {pipeline_mode = #tpu.pipeline_mode<synchronous>, transform_indices = @transform_5, window_bounds = array<i64: 1, 128>}, {pipeline_mode = #tpu.pipeline_mode<synchronous>, transform_indices = @transform_6, window_bounds = array<i64: 1, 128>}, {pipeline_mode = #tpu.pipeline_mode<synchronous>, transform_indices = @transform_7, window_bounds = array<i64: 8, 128>}, {pipeline_mode = #tpu.pipeline_mode<synchronous>, transform_indices = @transform_8, window_bounds = array<i64: 8, 128>}]} {
    %c0_i32 = arith.constant 0 : i32
    %0 = arith.cmpi eq, %arg0, %c0_i32 : i32
    %1 = arith.extui %0 : i1 to i32
    %c0_i32_0 = arith.constant 0 : i32
    %2 = arith.cmpi ne, %1, %c0_i32_0 : i32
    scf.if %2 {
      %cst_83 = arith.constant 0.000000e+00 : f32
      %374 = vector.broadcast %cst_83 : f32 to vector<8x128xf32>
      %c0_84 = arith.constant 0 : index
      %c0_85 = arith.constant 0 : index
      %375 = vector.load %arg10[%c0_84, %c0_85] : memref<8x128xf32, #tpu.memory_space<vmem>>, vector<8x128xf32>
      tpu.vector_store %arg10[%c0_84, %c0_85], %374 {strides = array<i32>} : memref<8x128xf32, #tpu.memory_space<vmem>>, vector<8x128xf32>,
      %cst_86 = arith.constant 0.000000e+00 : f32
      %376 = vector.broadcast %cst_86 : f32 to vector<8x128xf32>
      %c0_87 = arith.constant 0 : index
      %c0_88 = arith.constant 0 : index
      %377 = vector.load %arg11[%c0_87, %c0_88] : memref<8x128xf32, #tpu.memory_space<vmem>>, vector<8x128xf32>
      tpu.vector_store %arg11[%c0_87, %c0_88], %376 {strides = array<i32>} : memref<8x128xf32, #tpu.memory_space<vmem>>, vector<8x128xf32>,
    } else {
    }
    %c0 = arith.constant 0 : index
    %c0_1 = arith.constant 0 : index
    %3 = vector.load %arg1[%c0, %c0_1] : memref<8x1xi32, #tpu.memory_space<vmem>>, vector<8x1xi32>
    %c0_2 = arith.constant 0 : index
    %c0_3 = arith.constant 0 : index
    %4 = vector.load %arg4[%c0_2, %c0_3] : memref<128x384xf32, #tpu.memory_space<vmem>>, vector<128x384xf32>
    %c0_4 = arith.constant 0 : index
    %c0_5 = arith.constant 0 : index
    %5 = vector.load %arg5[%c0_4, %c0_5] : memref<128x384xf32, #tpu.memory_space<vmem>>, vector<128x384xf32>
    %c0_6 = arith.constant 0 : index
    %c0_7 = arith.constant 0 : index
    %6 = vector.load %arg6[%c0_6, %c0_7] : memref<1x128xf32, #tpu.memory_space<vmem>>, vector<1x128xf32>
    %c0_8 = arith.constant 0 : index
    %c0_9 = arith.constant 0 : index
    %7 = vector.load %arg7[%c0_8, %c0_9] : memref<1x128xf32, #tpu.memory_space<vmem>>, vector<1x128xf32>
    %c4_i32 = arith.constant 4 : i32
    %8 = arith.muli %arg0, %c4_i32 : i32
    %c1_i32 = arith.constant 1 : i32
    %9 = arith.subi %c1_i32, %arg0 : i32
    %c4_i32_10 = arith.constant 4 : i32
    %10 = arith.muli %9, %c4_i32_10 : i32
    %c0_11 = arith.constant 0 : index
    %c0_12 = arith.constant 0 : index
    %11 = vector.load %arg10[%c0_11, %c0_12] : memref<8x128xf32, #tpu.memory_space<vmem>>, vector<8x128xf32>
    %c0_13 = arith.constant 0 : index
    %c0_14 = arith.constant 0 : index
    %12 = vector.load %arg11[%c0_13, %c0_14] : memref<8x128xf32, #tpu.memory_space<vmem>>, vector<8x128xf32>
    %c0_i32_15 = arith.constant 0 : i32
    %c3_i32 = arith.constant 3 : i32
    %13 = arith.subi %c3_i32, %c0_i32_15 : i32
    %14 = arith.addi %8, %c0_i32_15 : i32
    %15 = vector.broadcast %14 : i32 to vector<8x1xi32>
    %16 = arith.cmpi sgt, %3, %15 : vector<8x1xi32>
    %17 = arith.extui %16 : vector<8x1xi1> to vector<8x1xi32>
    %18 = arith.sitofp %17 : vector<8x1xi32> to vector<8x1xf32>
    %19 = arith.addi %10, %13 : i32
    %20 = vector.broadcast %19 : i32 to vector<8x1xi32>
    %21 = arith.cmpi sgt, %3, %20 : vector<8x1xi32>
    %22 = arith.extui %21 : vector<8x1xi1> to vector<8x1xi32>
    %23 = arith.sitofp %22 : vector<8x1xi32> to vector<8x1xf32>
    %24 = arith.index_cast %c0_i32_15 : i32 to index
    %c0_16 = arith.constant 0 : index
    %c0_17 = arith.constant 0 : index
    %25 = vector.load %arg2[%24, %c0_16, %c0_17] : memref<4x8x384xf32, #tpu.memory_space<vmem>>, vector<1x8x384xf32>
    %26 = vector.shape_cast %25 : vector<1x8x384xf32> to vector<8x384xf32>
    %cst = arith.constant dense<0.000000e+00> : vector<8x384xf32>
    %27 = tpu.matmul %11, %4, %cst {dimension_numbers = #tpu.dot_dimension_numbers<[1], [0], [0], [1], [0, 0, 1, 1], [], []>} : vector<8x128xf32>, vector<128x384xf32>, vector<8x384xf32> -> vector<8x384xf32>
    %28 = vector.extract_strided_slice %26 {offsets = [0, 0], sizes = [8, 128], strides = [1, 1]} : vector<8x384xf32> to vector<8x128xf32>
    %29 = vector.extract_strided_slice %27 {offsets = [0, 0], sizes = [8, 128], strides = [1, 1]} : vector<8x384xf32> to vector<8x128xf32>
    %30 = arith.addf %28, %29 : vector<8x128xf32>
    %31 = arith.negf %30 : vector<8x128xf32>
    %32 = math.exp %31 : vector<8x128xf32>
    %cst_18 = arith.constant 1.000000e+00 : f32
    %33 = vector.broadcast %cst_18 : f32 to vector<8x128xf32>
    %34 = arith.addf %33, %32 : vector<8x128xf32>
    %35 = arith.divf %33, %34 : vector<8x128xf32>
    %36 = vector.extract_strided_slice %26 {offsets = [0, 128], sizes = [8, 128], strides = [1, 1]} : vector<8x384xf32> to vector<8x128xf32>
    %37 = vector.extract_strided_slice %27 {offsets = [0, 128], sizes = [8, 128], strides = [1, 1]} : vector<8x384xf32> to vector<8x128xf32>
    %38 = arith.addf %36, %37 : vector<8x128xf32>
    %39 = arith.negf %38 : vector<8x128xf32>
    %40 = math.exp %39 : vector<8x128xf32>
    %cst_19 = arith.constant 1.000000e+00 : f32
    %41 = vector.broadcast %cst_19 : f32 to vector<8x128xf32>
    %42 = arith.addf %41, %40 : vector<8x128xf32>
    %43 = arith.divf %41, %42 : vector<8x128xf32>
    %44 = vector.extract_strided_slice %26 {offsets = [0, 256], sizes = [8, 128], strides = [1, 1]} : vector<8x384xf32> to vector<8x128xf32>
    %45 = vector.extract_strided_slice %27 {offsets = [0, 256], sizes = [8, 128], strides = [1, 1]} : vector<8x384xf32> to vector<8x128xf32>
    %46 = vector.broadcast %6 : vector<1x128xf32> to vector<8x128xf32>
    %47 = arith.addf %45, %46 : vector<8x128xf32>
    %48 = arith.mulf %35, %47 : vector<8x128xf32>
    %49 = arith.addf %44, %48 : vector<8x128xf32>
    %50 = math.tanh %49 : vector<8x128xf32>
    %cst_20 = arith.constant 1.000000e+00 : f32
    %51 = vector.broadcast %cst_20 : f32 to vector<8x128xf32>
    %52 = arith.subf %51, %43 : vector<8x128xf32>
    %53 = arith.mulf %52, %50 : vector<8x128xf32>
    %54 = arith.mulf %43, %11 : vector<8x128xf32>
    %55 = arith.addf %53, %54 : vector<8x128xf32>
    %56 = arith.index_cast %13 : i32 to index
    %c0_21 = arith.constant 0 : index
    %c0_22 = arith.constant 0 : index
    %57 = vector.load %arg3[%56, %c0_21, %c0_22] : memref<4x8x384xf32, #tpu.memory_space<vmem>>, vector<1x8x384xf32>
    %58 = vector.shape_cast %57 : vector<1x8x384xf32> to vector<8x384xf32>
    %cst_23 = arith.constant dense<0.000000e+00> : vector<8x384xf32>
    %59 = tpu.matmul %12, %5, %cst_23 {dimension_numbers = #tpu.dot_dimension_numbers<[1], [0], [0], [1], [0, 0, 1, 1], [], []>} : vector<8x128xf32>, vector<128x384xf32>, vector<8x384xf32> -> vector<8x384xf32>
    %60 = vector.extract_strided_slice %58 {offsets = [0, 0], sizes = [8, 128], strides = [1, 1]} : vector<8x384xf32> to vector<8x128xf32>
    %61 = vector.extract_strided_slice %59 {offsets = [0, 0], sizes = [8, 128], strides = [1, 1]} : vector<8x384xf32> to vector<8x128xf32>
    %62 = arith.addf %60, %61 : vector<8x128xf32>
    %63 = arith.negf %62 : vector<8x128xf32>
    %64 = math.exp %63 : vector<8x128xf32>
    %cst_24 = arith.constant 1.000000e+00 : f32
    %65 = vector.broadcast %cst_24 : f32 to vector<8x128xf32>
    %66 = arith.addf %65, %64 : vector<8x128xf32>
    %67 = arith.divf %65, %66 : vector<8x128xf32>
    %68 = vector.extract_strided_slice %58 {offsets = [0, 128], sizes = [8, 128], strides = [1, 1]} : vector<8x384xf32> to vector<8x128xf32>
    %69 = vector.extract_strided_slice %59 {offsets = [0, 128], sizes = [8, 128], strides = [1, 1]} : vector<8x384xf32> to vector<8x128xf32>
    %70 = arith.addf %68, %69 : vector<8x128xf32>
    %71 = arith.negf %70 : vector<8x128xf32>
    %72 = math.exp %71 : vector<8x128xf32>
    %cst_25 = arith.constant 1.000000e+00 : f32
    %73 = vector.broadcast %cst_25 : f32 to vector<8x128xf32>
    %74 = arith.addf %73, %72 : vector<8x128xf32>
    %75 = arith.divf %73, %74 : vector<8x128xf32>
    %76 = vector.extract_strided_slice %58 {offsets = [0, 256], sizes = [8, 128], strides = [1, 1]} : vector<8x384xf32> to vector<8x128xf32>
    %77 = vector.extract_strided_slice %59 {offsets = [0, 256], sizes = [8, 128], strides = [1, 1]} : vector<8x384xf32> to vector<8x128xf32>
    %78 = vector.broadcast %7 : vector<1x128xf32> to vector<8x128xf32>
    %79 = arith.addf %77, %78 : vector<8x128xf32>
    %80 = arith.mulf %67, %79 : vector<8x128xf32>
    %81 = arith.addf %76, %80 : vector<8x128xf32>
    %82 = math.tanh %81 : vector<8x128xf32>
    %cst_26 = arith.constant 1.000000e+00 : f32
    %83 = vector.broadcast %cst_26 : f32 to vector<8x128xf32>
    %84 = arith.subf %83, %75 : vector<8x128xf32>
    %85 = arith.mulf %84, %82 : vector<8x128xf32>
    %86 = arith.mulf %75, %12 : vector<8x128xf32>
    %87 = arith.addf %85, %86 : vector<8x128xf32>
    %88 = vector.broadcast %18 : vector<8x1xf32> to vector<8x128xf32>
    %89 = arith.mulf %88, %55 : vector<8x128xf32>
    %cst_27 = arith.constant 1.000000e+00 : f32
    %90 = vector.broadcast %cst_27 : f32 to vector<8x1xf32>
    %91 = arith.subf %90, %18 : vector<8x1xf32>
    %92 = vector.broadcast %91 : vector<8x1xf32> to vector<8x128xf32>
    %93 = arith.mulf %92, %11 : vector<8x128xf32>
    %94 = arith.addf %89, %93 : vector<8x128xf32>
    %95 = vector.broadcast %23 : vector<8x1xf32> to vector<8x128xf32>
    %96 = arith.mulf %95, %87 : vector<8x128xf32>
    %cst_28 = arith.constant 1.000000e+00 : f32
    %97 = vector.broadcast %cst_28 : f32 to vector<8x1xf32>
    %98 = arith.subf %97, %23 : vector<8x1xf32>
    %99 = vector.broadcast %98 : vector<8x1xf32> to vector<8x128xf32>
    %100 = arith.mulf %99, %12 : vector<8x128xf32>
    %101 = arith.addf %96, %100 : vector<8x128xf32>
    %c1_i32_29 = arith.constant 1 : i32
    %c3_i32_30 = arith.constant 3 : i32
    %102 = arith.subi %c3_i32_30, %c1_i32_29 : i32
    %103 = arith.addi %8, %c1_i32_29 : i32
    %104 = vector.broadcast %103 : i32 to vector<8x1xi32>
    %105 = arith.cmpi sgt, %3, %104 : vector<8x1xi32>
    %106 = arith.extui %105 : vector<8x1xi1> to vector<8x1xi32>
    %107 = arith.sitofp %106 : vector<8x1xi32> to vector<8x1xf32>
    %108 = arith.addi %10, %102 : i32
    %109 = vector.broadcast %108 : i32 to vector<8x1xi32>
    %110 = arith.cmpi sgt, %3, %109 : vector<8x1xi32>
    %111 = arith.extui %110 : vector<8x1xi1> to vector<8x1xi32>
    %112 = arith.sitofp %111 : vector<8x1xi32> to vector<8x1xf32>
    %113 = arith.index_cast %c1_i32_29 : i32 to index
    %c0_31 = arith.constant 0 : index
    %c0_32 = arith.constant 0 : index
    %114 = vector.load %arg2[%113, %c0_31, %c0_32] : memref<4x8x384xf32, #tpu.memory_space<vmem>>, vector<1x8x384xf32>
    %115 = vector.shape_cast %114 : vector<1x8x384xf32> to vector<8x384xf32>
    %cst_33 = arith.constant dense<0.000000e+00> : vector<8x384xf32>
    %116 = tpu.matmul %94, %4, %cst_33 {dimension_numbers = #tpu.dot_dimension_numbers<[1], [0], [0], [1], [0, 0, 1, 1], [], []>} : vector<8x128xf32>, vector<128x384xf32>, vector<8x384xf32> -> vector<8x384xf32>
    %117 = vector.extract_strided_slice %115 {offsets = [0, 0], sizes = [8, 128], strides = [1, 1]} : vector<8x384xf32> to vector<8x128xf32>
    %118 = vector.extract_strided_slice %116 {offsets = [0, 0], sizes = [8, 128], strides = [1, 1]} : vector<8x384xf32> to vector<8x128xf32>
    %119 = arith.addf %117, %118 : vector<8x128xf32>
    %120 = arith.negf %119 : vector<8x128xf32>
    %121 = math.exp %120 : vector<8x128xf32>
    %cst_34 = arith.constant 1.000000e+00 : f32
    %122 = vector.broadcast %cst_34 : f32 to vector<8x128xf32>
    %123 = arith.addf %122, %121 : vector<8x128xf32>
    %124 = arith.divf %122, %123 : vector<8x128xf32>
    %125 = vector.extract_strided_slice %115 {offsets = [0, 128], sizes = [8, 128], strides = [1, 1]} : vector<8x384xf32> to vector<8x128xf32>
    %126 = vector.extract_strided_slice %116 {offsets = [0, 128], sizes = [8, 128], strides = [1, 1]} : vector<8x384xf32> to vector<8x128xf32>
    %127 = arith.addf %125, %126 : vector<8x128xf32>
    %128 = arith.negf %127 : vector<8x128xf32>
    %129 = math.exp %128 : vector<8x128xf32>
    %cst_35 = arith.constant 1.000000e+00 : f32
    %130 = vector.broadcast %cst_35 : f32 to vector<8x128xf32>
    %131 = arith.addf %130, %129 : vector<8x128xf32>
    %132 = arith.divf %130, %131 : vector<8x128xf32>
    %133 = vector.extract_strided_slice %115 {offsets = [0, 256], sizes = [8, 128], strides = [1, 1]} : vector<8x384xf32> to vector<8x128xf32>
    %134 = vector.extract_strided_slice %116 {offsets = [0, 256], sizes = [8, 128], strides = [1, 1]} : vector<8x384xf32> to vector<8x128xf32>
    %135 = vector.broadcast %6 : vector<1x128xf32> to vector<8x128xf32>
    %136 = arith.addf %134, %135 : vector<8x128xf32>
    %137 = arith.mulf %124, %136 : vector<8x128xf32>
    %138 = arith.addf %133, %137 : vector<8x128xf32>
    %139 = math.tanh %138 : vector<8x128xf32>
    %cst_36 = arith.constant 1.000000e+00 : f32
    %140 = vector.broadcast %cst_36 : f32 to vector<8x128xf32>
    %141 = arith.subf %140, %132 : vector<8x128xf32>
    %142 = arith.mulf %141, %139 : vector<8x128xf32>
    %143 = arith.mulf %132, %94 : vector<8x128xf32>
    %144 = arith.addf %142, %143 : vector<8x128xf32>
    %145 = arith.index_cast %102 : i32 to index
    %c0_37 = arith.constant 0 : index
    %c0_38 = arith.constant 0 : index
    %146 = vector.load %arg3[%145, %c0_37, %c0_38] : memref<4x8x384xf32, #tpu.memory_space<vmem>>, vector<1x8x384xf32>
    %147 = vector.shape_cast %146 : vector<1x8x384xf32> to vector<8x384xf32>
    %cst_39 = arith.constant dense<0.000000e+00> : vector<8x384xf32>
    %148 = tpu.matmul %101, %5, %cst_39 {dimension_numbers = #tpu.dot_dimension_numbers<[1], [0], [0], [1], [0, 0, 1, 1], [], []>} : vector<8x128xf32>, vector<128x384xf32>, vector<8x384xf32> -> vector<8x384xf32>
    %149 = vector.extract_strided_slice %147 {offsets = [0, 0], sizes = [8, 128], strides = [1, 1]} : vector<8x384xf32> to vector<8x128xf32>
    %150 = vector.extract_strided_slice %148 {offsets = [0, 0], sizes = [8, 128], strides = [1, 1]} : vector<8x384xf32> to vector<8x128xf32>
    %151 = arith.addf %149, %150 : vector<8x128xf32>
    %152 = arith.negf %151 : vector<8x128xf32>
    %153 = math.exp %152 : vector<8x128xf32>
    %cst_40 = arith.constant 1.000000e+00 : f32
    %154 = vector.broadcast %cst_40 : f32 to vector<8x128xf32>
    %155 = arith.addf %154, %153 : vector<8x128xf32>
    %156 = arith.divf %154, %155 : vector<8x128xf32>
    %157 = vector.extract_strided_slice %147 {offsets = [0, 128], sizes = [8, 128], strides = [1, 1]} : vector<8x384xf32> to vector<8x128xf32>
    %158 = vector.extract_strided_slice %148 {offsets = [0, 128], sizes = [8, 128], strides = [1, 1]} : vector<8x384xf32> to vector<8x128xf32>
    %159 = arith.addf %157, %158 : vector<8x128xf32>
    %160 = arith.negf %159 : vector<8x128xf32>
    %161 = math.exp %160 : vector<8x128xf32>
    %cst_41 = arith.constant 1.000000e+00 : f32
    %162 = vector.broadcast %cst_41 : f32 to vector<8x128xf32>
    %163 = arith.addf %162, %161 : vector<8x128xf32>
    %164 = arith.divf %162, %163 : vector<8x128xf32>
    %165 = vector.extract_strided_slice %147 {offsets = [0, 256], sizes = [8, 128], strides = [1, 1]} : vector<8x384xf32> to vector<8x128xf32>
    %166 = vector.extract_strided_slice %148 {offsets = [0, 256], sizes = [8, 128], strides = [1, 1]} : vector<8x384xf32> to vector<8x128xf32>
    %167 = vector.broadcast %7 : vector<1x128xf32> to vector<8x128xf32>
    %168 = arith.addf %166, %167 : vector<8x128xf32>
    %169 = arith.mulf %156, %168 : vector<8x128xf32>
    %170 = arith.addf %165, %169 : vector<8x128xf32>
    %171 = math.tanh %170 : vector<8x128xf32>
    %cst_42 = arith.constant 1.000000e+00 : f32
    %172 = vector.broadcast %cst_42 : f32 to vector<8x128xf32>
    %173 = arith.subf %172, %164 : vector<8x128xf32>
    %174 = arith.mulf %173, %171 : vector<8x128xf32>
    %175 = arith.mulf %164, %101 : vector<8x128xf32>
    %176 = arith.addf %174, %175 : vector<8x128xf32>
    %177 = vector.broadcast %107 : vector<8x1xf32> to vector<8x128xf32>
    %178 = arith.mulf %177, %144 : vector<8x128xf32>
    %cst_43 = arith.constant 1.000000e+00 : f32
    %179 = vector.broadcast %cst_43 : f32 to vector<8x1xf32>
    %180 = arith.subf %179, %107 : vector<8x1xf32>
    %181 = vector.broadcast %180 : vector<8x1xf32> to vector<8x128xf32>
    %182 = arith.mulf %181, %94 : vector<8x128xf32>
    %183 = arith.addf %178, %182 : vector<8x128xf32>
    %184 = vector.broadcast %112 : vector<8x1xf32> to vector<8x128xf32>
    %185 = arith.mulf %184, %176 : vector<8x128xf32>
    %cst_44 = arith.constant 1.000000e+00 : f32
    %186 = vector.broadcast %cst_44 : f32 to vector<8x1xf32>
    %187 = arith.subf %186, %112 : vector<8x1xf32>
    %188 = vector.broadcast %187 : vector<8x1xf32> to vector<8x128xf32>
    %189 = arith.mulf %188, %101 : vector<8x128xf32>
    %190 = arith.addf %185, %189 : vector<8x128xf32>
    %c2_i32 = arith.constant 2 : i32
    %c3_i32_45 = arith.constant 3 : i32
    %191 = arith.subi %c3_i32_45, %c2_i32 : i32
    %192 = arith.addi %8, %c2_i32 : i32
    %193 = vector.broadcast %192 : i32 to vector<8x1xi32>
    %194 = arith.cmpi sgt, %3, %193 : vector<8x1xi32>
    %195 = arith.extui %194 : vector<8x1xi1> to vector<8x1xi32>
    %196 = arith.sitofp %195 : vector<8x1xi32> to vector<8x1xf32>
    %197 = arith.addi %10, %191 : i32
    %198 = vector.broadcast %197 : i32 to vector<8x1xi32>
    %199 = arith.cmpi sgt, %3, %198 : vector<8x1xi32>
    %200 = arith.extui %199 : vector<8x1xi1> to vector<8x1xi32>
    %201 = arith.sitofp %200 : vector<8x1xi32> to vector<8x1xf32>
    %202 = arith.index_cast %c2_i32 : i32 to index
    %c0_46 = arith.constant 0 : index
    %c0_47 = arith.constant 0 : index
    %203 = vector.load %arg2[%202, %c0_46, %c0_47] : memref<4x8x384xf32, #tpu.memory_space<vmem>>, vector<1x8x384xf32>
    %204 = vector.shape_cast %203 : vector<1x8x384xf32> to vector<8x384xf32>
    %cst_48 = arith.constant dense<0.000000e+00> : vector<8x384xf32>
    %205 = tpu.matmul %183, %4, %cst_48 {dimension_numbers = #tpu.dot_dimension_numbers<[1], [0], [0], [1], [0, 0, 1, 1], [], []>} : vector<8x128xf32>, vector<128x384xf32>, vector<8x384xf32> -> vector<8x384xf32>
    %206 = vector.extract_strided_slice %204 {offsets = [0, 0], sizes = [8, 128], strides = [1, 1]} : vector<8x384xf32> to vector<8x128xf32>
    %207 = vector.extract_strided_slice %205 {offsets = [0, 0], sizes = [8, 128], strides = [1, 1]} : vector<8x384xf32> to vector<8x128xf32>
    %208 = arith.addf %206, %207 : vector<8x128xf32>
    %209 = arith.negf %208 : vector<8x128xf32>
    %210 = math.exp %209 : vector<8x128xf32>
    %cst_49 = arith.constant 1.000000e+00 : f32
    %211 = vector.broadcast %cst_49 : f32 to vector<8x128xf32>
    %212 = arith.addf %211, %210 : vector<8x128xf32>
    %213 = arith.divf %211, %212 : vector<8x128xf32>
    %214 = vector.extract_strided_slice %204 {offsets = [0, 128], sizes = [8, 128], strides = [1, 1]} : vector<8x384xf32> to vector<8x128xf32>
    %215 = vector.extract_strided_slice %205 {offsets = [0, 128], sizes = [8, 128], strides = [1, 1]} : vector<8x384xf32> to vector<8x128xf32>
    %216 = arith.addf %214, %215 : vector<8x128xf32>
    %217 = arith.negf %216 : vector<8x128xf32>
    %218 = math.exp %217 : vector<8x128xf32>
    %cst_50 = arith.constant 1.000000e+00 : f32
    %219 = vector.broadcast %cst_50 : f32 to vector<8x128xf32>
    %220 = arith.addf %219, %218 : vector<8x128xf32>
    %221 = arith.divf %219, %220 : vector<8x128xf32>
    %222 = vector.extract_strided_slice %204 {offsets = [0, 256], sizes = [8, 128], strides = [1, 1]} : vector<8x384xf32> to vector<8x128xf32>
    %223 = vector.extract_strided_slice %205 {offsets = [0, 256], sizes = [8, 128], strides = [1, 1]} : vector<8x384xf32> to vector<8x128xf32>
    %224 = vector.broadcast %6 : vector<1x128xf32> to vector<8x128xf32>
    %225 = arith.addf %223, %224 : vector<8x128xf32>
    %226 = arith.mulf %213, %225 : vector<8x128xf32>
    %227 = arith.addf %222, %226 : vector<8x128xf32>
    %228 = math.tanh %227 : vector<8x128xf32>
    %cst_51 = arith.constant 1.000000e+00 : f32
    %229 = vector.broadcast %cst_51 : f32 to vector<8x128xf32>
    %230 = arith.subf %229, %221 : vector<8x128xf32>
    %231 = arith.mulf %230, %228 : vector<8x128xf32>
    %232 = arith.mulf %221, %183 : vector<8x128xf32>
    %233 = arith.addf %231, %232 : vector<8x128xf32>
    %234 = arith.index_cast %191 : i32 to index
    %c0_52 = arith.constant 0 : index
    %c0_53 = arith.constant 0 : index
    %235 = vector.load %arg3[%234, %c0_52, %c0_53] : memref<4x8x384xf32, #tpu.memory_space<vmem>>, vector<1x8x384xf32>
    %236 = vector.shape_cast %235 : vector<1x8x384xf32> to vector<8x384xf32>
    %cst_54 = arith.constant dense<0.000000e+00> : vector<8x384xf32>
    %237 = tpu.matmul %190, %5, %cst_54 {dimension_numbers = #tpu.dot_dimension_numbers<[1], [0], [0], [1], [0, 0, 1, 1], [], []>} : vector<8x128xf32>, vector<128x384xf32>, vector<8x384xf32> -> vector<8x384xf32>
    %238 = vector.extract_strided_slice %236 {offsets = [0, 0], sizes = [8, 128], strides = [1, 1]} : vector<8x384xf32> to vector<8x128xf32>
    %239 = vector.extract_strided_slice %237 {offsets = [0, 0], sizes = [8, 128], strides = [1, 1]} : vector<8x384xf32> to vector<8x128xf32>
    %240 = arith.addf %238, %239 : vector<8x128xf32>
    %241 = arith.negf %240 : vector<8x128xf32>
    %242 = math.exp %241 : vector<8x128xf32>
    %cst_55 = arith.constant 1.000000e+00 : f32
    %243 = vector.broadcast %cst_55 : f32 to vector<8x128xf32>
    %244 = arith.addf %243, %242 : vector<8x128xf32>
    %245 = arith.divf %243, %244 : vector<8x128xf32>
    %246 = vector.extract_strided_slice %236 {offsets = [0, 128], sizes = [8, 128], strides = [1, 1]} : vector<8x384xf32> to vector<8x128xf32>
    %247 = vector.extract_strided_slice %237 {offsets = [0, 128], sizes = [8, 128], strides = [1, 1]} : vector<8x384xf32> to vector<8x128xf32>
    %248 = arith.addf %246, %247 : vector<8x128xf32>
    %249 = arith.negf %248 : vector<8x128xf32>
    %250 = math.exp %249 : vector<8x128xf32>
    %cst_56 = arith.constant 1.000000e+00 : f32
    %251 = vector.broadcast %cst_56 : f32 to vector<8x128xf32>
    %252 = arith.addf %251, %250 : vector<8x128xf32>
    %253 = arith.divf %251, %252 : vector<8x128xf32>
    %254 = vector.extract_strided_slice %236 {offsets = [0, 256], sizes = [8, 128], strides = [1, 1]} : vector<8x384xf32> to vector<8x128xf32>
    %255 = vector.extract_strided_slice %237 {offsets = [0, 256], sizes = [8, 128], strides = [1, 1]} : vector<8x384xf32> to vector<8x128xf32>
    %256 = vector.broadcast %7 : vector<1x128xf32> to vector<8x128xf32>
    %257 = arith.addf %255, %256 : vector<8x128xf32>
    %258 = arith.mulf %245, %257 : vector<8x128xf32>
    %259 = arith.addf %254, %258 : vector<8x128xf32>
    %260 = math.tanh %259 : vector<8x128xf32>
    %cst_57 = arith.constant 1.000000e+00 : f32
    %261 = vector.broadcast %cst_57 : f32 to vector<8x128xf32>
    %262 = arith.subf %261, %253 : vector<8x128xf32>
    %263 = arith.mulf %262, %260 : vector<8x128xf32>
    %264 = arith.mulf %253, %190 : vector<8x128xf32>
    %265 = arith.addf %263, %264 : vector<8x128xf32>
    %266 = vector.broadcast %196 : vector<8x1xf32> to vector<8x128xf32>
    %267 = arith.mulf %266, %233 : vector<8x128xf32>
    %cst_58 = arith.constant 1.000000e+00 : f32
    %268 = vector.broadcast %cst_58 : f32 to vector<8x1xf32>
    %269 = arith.subf %268, %196 : vector<8x1xf32>
    %270 = vector.broadcast %269 : vector<8x1xf32> to vector<8x128xf32>
    %271 = arith.mulf %270, %183 : vector<8x128xf32>
    %272 = arith.addf %267, %271 : vector<8x128xf32>
    %273 = vector.broadcast %201 : vector<8x1xf32> to vector<8x128xf32>
    %274 = arith.mulf %273, %265 : vector<8x128xf32>
    %cst_59 = arith.constant 1.000000e+00 : f32
    %275 = vector.broadcast %cst_59 : f32 to vector<8x1xf32>
    %276 = arith.subf %275, %201 : vector<8x1xf32>
    %277 = vector.broadcast %276 : vector<8x1xf32> to vector<8x128xf32>
    %278 = arith.mulf %277, %190 : vector<8x128xf32>
    %279 = arith.addf %274, %278 : vector<8x128xf32>
    %c3_i32_60 = arith.constant 3 : i32
    %c3_i32_61 = arith.constant 3 : i32
    %280 = arith.subi %c3_i32_61, %c3_i32_60 : i32
    %281 = arith.addi %8, %c3_i32_60 : i32
    %282 = vector.broadcast %281 : i32 to vector<8x1xi32>
    %283 = arith.cmpi sgt, %3, %282 : vector<8x1xi32>
    %284 = arith.extui %283 : vector<8x1xi1> to vector<8x1xi32>
    %285 = arith.sitofp %284 : vector<8x1xi32> to vector<8x1xf32>
    %286 = arith.addi %10, %280 : i32
    %287 = vector.broadcast %286 : i32 to vector<8x1xi32>
    %288 = arith.cmpi sgt, %3, %287 : vector<8x1xi32>
    %289 = arith.extui %288 : vector<8x1xi1> to vector<8x1xi32>
    %290 = arith.sitofp %289 : vector<8x1xi32> to vector<8x1xf32>
    %291 = arith.index_cast %c3_i32_60 : i32 to index
    %c0_62 = arith.constant 0 : index
    %c0_63 = arith.constant 0 : index
    %292 = vector.load %arg2[%291, %c0_62, %c0_63] : memref<4x8x384xf32, #tpu.memory_space<vmem>>, vector<1x8x384xf32>
    %293 = vector.shape_cast %292 : vector<1x8x384xf32> to vector<8x384xf32>
    %cst_64 = arith.constant dense<0.000000e+00> : vector<8x384xf32>
    %294 = tpu.matmul %272, %4, %cst_64 {dimension_numbers = #tpu.dot_dimension_numbers<[1], [0], [0], [1], [0, 0, 1, 1], [], []>} : vector<8x128xf32>, vector<128x384xf32>, vector<8x384xf32> -> vector<8x384xf32>
    %295 = vector.extract_strided_slice %293 {offsets = [0, 0], sizes = [8, 128], strides = [1, 1]} : vector<8x384xf32> to vector<8x128xf32>
    %296 = vector.extract_strided_slice %294 {offsets = [0, 0], sizes = [8, 128], strides = [1, 1]} : vector<8x384xf32> to vector<8x128xf32>
    %297 = arith.addf %295, %296 : vector<8x128xf32>
    %298 = arith.negf %297 : vector<8x128xf32>
    %299 = math.exp %298 : vector<8x128xf32>
    %cst_65 = arith.constant 1.000000e+00 : f32
    %300 = vector.broadcast %cst_65 : f32 to vector<8x128xf32>
    %301 = arith.addf %300, %299 : vector<8x128xf32>
    %302 = arith.divf %300, %301 : vector<8x128xf32>
    %303 = vector.extract_strided_slice %293 {offsets = [0, 128], sizes = [8, 128], strides = [1, 1]} : vector<8x384xf32> to vector<8x128xf32>
    %304 = vector.extract_strided_slice %294 {offsets = [0, 128], sizes = [8, 128], strides = [1, 1]} : vector<8x384xf32> to vector<8x128xf32>
    %305 = arith.addf %303, %304 : vector<8x128xf32>
    %306 = arith.negf %305 : vector<8x128xf32>
    %307 = math.exp %306 : vector<8x128xf32>
    %cst_66 = arith.constant 1.000000e+00 : f32
    %308 = vector.broadcast %cst_66 : f32 to vector<8x128xf32>
    %309 = arith.addf %308, %307 : vector<8x128xf32>
    %310 = arith.divf %308, %309 : vector<8x128xf32>
    %311 = vector.extract_strided_slice %293 {offsets = [0, 256], sizes = [8, 128], strides = [1, 1]} : vector<8x384xf32> to vector<8x128xf32>
    %312 = vector.extract_strided_slice %294 {offsets = [0, 256], sizes = [8, 128], strides = [1, 1]} : vector<8x384xf32> to vector<8x128xf32>
    %313 = vector.broadcast %6 : vector<1x128xf32> to vector<8x128xf32>
    %314 = arith.addf %312, %313 : vector<8x128xf32>
    %315 = arith.mulf %302, %314 : vector<8x128xf32>
    %316 = arith.addf %311, %315 : vector<8x128xf32>
    %317 = math.tanh %316 : vector<8x128xf32>
    %cst_67 = arith.constant 1.000000e+00 : f32
    %318 = vector.broadcast %cst_67 : f32 to vector<8x128xf32>
    %319 = arith.subf %318, %310 : vector<8x128xf32>
    %320 = arith.mulf %319, %317 : vector<8x128xf32>
    %321 = arith.mulf %310, %272 : vector<8x128xf32>
    %322 = arith.addf %320, %321 : vector<8x128xf32>
    %323 = arith.index_cast %280 : i32 to index
    %c0_68 = arith.constant 0 : index
    %c0_69 = arith.constant 0 : index
    %324 = vector.load %arg3[%323, %c0_68, %c0_69] : memref<4x8x384xf32, #tpu.memory_space<vmem>>, vector<1x8x384xf32>
    %325 = vector.shape_cast %324 : vector<1x8x384xf32> to vector<8x384xf32>
    %cst_70 = arith.constant dense<0.000000e+00> : vector<8x384xf32>
    %326 = tpu.matmul %279, %5, %cst_70 {dimension_numbers = #tpu.dot_dimension_numbers<[1], [0], [0], [1], [0, 0, 1, 1], [], []>} : vector<8x128xf32>, vector<128x384xf32>, vector<8x384xf32> -> vector<8x384xf32>
    %327 = vector.extract_strided_slice %325 {offsets = [0, 0], sizes = [8, 128], strides = [1, 1]} : vector<8x384xf32> to vector<8x128xf32>
    %328 = vector.extract_strided_slice %326 {offsets = [0, 0], sizes = [8, 128], strides = [1, 1]} : vector<8x384xf32> to vector<8x128xf32>
    %329 = arith.addf %327, %328 : vector<8x128xf32>
    %330 = arith.negf %329 : vector<8x128xf32>
    %331 = math.exp %330 : vector<8x128xf32>
    %cst_71 = arith.constant 1.000000e+00 : f32
    %332 = vector.broadcast %cst_71 : f32 to vector<8x128xf32>
    %333 = arith.addf %332, %331 : vector<8x128xf32>
    %334 = arith.divf %332, %333 : vector<8x128xf32>
    %335 = vector.extract_strided_slice %325 {offsets = [0, 128], sizes = [8, 128], strides = [1, 1]} : vector<8x384xf32> to vector<8x128xf32>
    %336 = vector.extract_strided_slice %326 {offsets = [0, 128], sizes = [8, 128], strides = [1, 1]} : vector<8x384xf32> to vector<8x128xf32>
    %337 = arith.addf %335, %336 : vector<8x128xf32>
    %338 = arith.negf %337 : vector<8x128xf32>
    %339 = math.exp %338 : vector<8x128xf32>
    %cst_72 = arith.constant 1.000000e+00 : f32
    %340 = vector.broadcast %cst_72 : f32 to vector<8x128xf32>
    %341 = arith.addf %340, %339 : vector<8x128xf32>
    %342 = arith.divf %340, %341 : vector<8x128xf32>
    %343 = vector.extract_strided_slice %325 {offsets = [0, 256], sizes = [8, 128], strides = [1, 1]} : vector<8x384xf32> to vector<8x128xf32>
    %344 = vector.extract_strided_slice %326 {offsets = [0, 256], sizes = [8, 128], strides = [1, 1]} : vector<8x384xf32> to vector<8x128xf32>
    %345 = vector.broadcast %7 : vector<1x128xf32> to vector<8x128xf32>
    %346 = arith.addf %344, %345 : vector<8x128xf32>
    %347 = arith.mulf %334, %346 : vector<8x128xf32>
    %348 = arith.addf %343, %347 : vector<8x128xf32>
    %349 = math.tanh %348 : vector<8x128xf32>
    %cst_73 = arith.constant 1.000000e+00 : f32
    %350 = vector.broadcast %cst_73 : f32 to vector<8x128xf32>
    %351 = arith.subf %350, %342 : vector<8x128xf32>
    %352 = arith.mulf %351, %349 : vector<8x128xf32>
    %353 = arith.mulf %342, %279 : vector<8x128xf32>
    %354 = arith.addf %352, %353 : vector<8x128xf32>
    %355 = vector.broadcast %285 : vector<8x1xf32> to vector<8x128xf32>
    %356 = arith.mulf %355, %322 : vector<8x128xf32>
    %cst_74 = arith.constant 1.000000e+00 : f32
    %357 = vector.broadcast %cst_74 : f32 to vector<8x1xf32>
    %358 = arith.subf %357, %285 : vector<8x1xf32>
    %359 = vector.broadcast %358 : vector<8x1xf32> to vector<8x128xf32>
    %360 = arith.mulf %359, %272 : vector<8x128xf32>
    %361 = arith.addf %356, %360 : vector<8x128xf32>
    %362 = vector.broadcast %290 : vector<8x1xf32> to vector<8x128xf32>
    %363 = arith.mulf %362, %354 : vector<8x128xf32>
    %cst_75 = arith.constant 1.000000e+00 : f32
    %364 = vector.broadcast %cst_75 : f32 to vector<8x1xf32>
    %365 = arith.subf %364, %290 : vector<8x1xf32>
    %366 = vector.broadcast %365 : vector<8x1xf32> to vector<8x128xf32>
    %367 = arith.mulf %366, %279 : vector<8x128xf32>
    %368 = arith.addf %363, %367 : vector<8x128xf32>
    %c4_i32_76 = arith.constant 4 : i32
    %c0_77 = arith.constant 0 : index
    %c0_78 = arith.constant 0 : index
    %369 = vector.load %arg10[%c0_77, %c0_78] : memref<8x128xf32, #tpu.memory_space<vmem>>, vector<8x128xf32>
    tpu.vector_store %arg10[%c0_77, %c0_78], %361 {strides = array<i32>} : memref<8x128xf32, #tpu.memory_space<vmem>>, vector<8x128xf32>,
    %c0_79 = arith.constant 0 : index
    %c0_80 = arith.constant 0 : index
    %370 = vector.load %arg11[%c0_79, %c0_80] : memref<8x128xf32, #tpu.memory_space<vmem>>, vector<8x128xf32>
    tpu.vector_store %arg11[%c0_79, %c0_80], %368 {strides = array<i32>} : memref<8x128xf32, #tpu.memory_space<vmem>>, vector<8x128xf32>,
    %c1_i32_81 = arith.constant 1 : i32
    %371 = arith.cmpi eq, %arg0, %c1_i32_81 : i32
    %372 = arith.extui %371 : i1 to i32
    %c0_i32_82 = arith.constant 0 : i32
    %373 = arith.cmpi ne, %372, %c0_i32_82 : i32
    scf.if %373 {
      %c0_83 = arith.constant 0 : index
      %c0_84 = arith.constant 0 : index
      %374 = vector.load %arg8[%c0_83, %c0_84] : memref<8x128xf32, #tpu.memory_space<vmem>>, vector<8x128xf32>
      tpu.vector_store %arg8[%c0_83, %c0_84], %361 {strides = array<i32>} : memref<8x128xf32, #tpu.memory_space<vmem>>, vector<8x128xf32>,
      %c0_85 = arith.constant 0 : index
      %c0_86 = arith.constant 0 : index
      %375 = vector.load %arg9[%c0_85, %c0_86] : memref<8x128xf32, #tpu.memory_space<vmem>>, vector<8x128xf32>
      tpu.vector_store %arg9[%c0_85, %c0_86], %368 {strides = array<i32>} : memref<8x128xf32, #tpu.memory_space<vmem>>, vector<8x128xf32>,
    } else {
    }
    return
  }
  func.func @transform_0(%arg0: i32) -> (i32, i32) {
    %c0_i32 = arith.constant 0 : i32
    %c0_i32_0 = arith.constant 0 : i32
    %c0_i32_1 = arith.constant 0 : i32
    return %c0_i32, %c0_i32_0 : i32, i32
  }
  func.func @transform_1(%arg0: i32) -> (i32, i32, i32) {
    %c0_i32 = arith.constant 0 : i32
    %c0_i32_0 = arith.constant 0 : i32
    %c0_i32_1 = arith.constant 0 : i32
    return %arg0, %c0_i32, %c0_i32_0 : i32, i32, i32
  }
  func.func @transform_2(%arg0: i32) -> (i32, i32, i32) {
    %c1_i32 = arith.constant 1 : i32
    %0 = arith.subi %c1_i32, %arg0 : i32
    %c0_i32 = arith.constant 0 : i32
    %c0_i32_0 = arith.constant 0 : i32
    %c0_i32_1 = arith.constant 0 : i32
    return %0, %c0_i32, %c0_i32_0 : i32, i32, i32
  }
  func.func @transform_3(%arg0: i32) -> (i32, i32) {
    %c0_i32 = arith.constant 0 : i32
    %c0_i32_0 = arith.constant 0 : i32
    %c0_i32_1 = arith.constant 0 : i32
    return %c0_i32, %c0_i32_0 : i32, i32
  }
  func.func @transform_4(%arg0: i32) -> (i32, i32) {
    %c0_i32 = arith.constant 0 : i32
    %c0_i32_0 = arith.constant 0 : i32
    %c0_i32_1 = arith.constant 0 : i32
    return %c0_i32, %c0_i32_0 : i32, i32
  }
  func.func @transform_5(%arg0: i32) -> (i32, i32) {
    %c0_i32 = arith.constant 0 : i32
    %c0_i32_0 = arith.constant 0 : i32
    %c0_i32_1 = arith.constant 0 : i32
    return %c0_i32, %c0_i32_0 : i32, i32
  }
  func.func @transform_6(%arg0: i32) -> (i32, i32) {
    %c0_i32 = arith.constant 0 : i32
    %c0_i32_0 = arith.constant 0 : i32
    %c0_i32_1 = arith.constant 0 : i32
    return %c0_i32, %c0_i32_0 : i32, i32
  }
  func.func @transform_7(%arg0: i32) -> (i32, i32) {
    %c0_i32 = arith.constant 0 : i32
    %c0_i32_0 = arith.constant 0 : i32
    %c0_i32_1 = arith.constant 0 : i32
    return %c0_i32, %c0_i32_0 : i32, i32
  }
  func.func @transform_8(%arg0: i32) -> (i32, i32) {
    %c0_i32 = arith.constant 0 : i32
    %c0_i32_0 = arith.constant 0 : i32
    %c0_i32_1 = arith.constant 0 : i32
    return %c0_i32, %c0_i32_0 : i32, i32
  }
}

</mosaic_0001>

<llo_original>
// kernel: tpu_custom_call.1
$region0: #{tpu_custom_call.1}
  #allocation0 [shape = 'u32[]', space=smem, size = 0x4, offset = 0x4, fixed_abs, tag = 'smem constant byte address 0x4 - core index']
  #allocation1 [shape = 'u32[144,128]{1,0:T(1,128)}', space=vmem, size = 0x12000, scoped, tag = 'internal scratch']
  #allocation2 [shape = 'f32[8,128]{1,0:T(8,128)}', space=vmem, size = 0x1000, scoped, tag = 'scratch operand']
  #allocation3 [shape = 'f32[8,128]{1,0:T(8,128)}', space=vmem, size = 0x1000, scoped, tag = 'scratch operand']
  %s0 = inlined_call_operand.hbm [shape: s32[8,1], index: 0, kind: input, shape index: {}]
  %s1 = inlined_call_operand.hbm [shape: f32[8,8,384], index: 1, kind: input, shape index: {}]
  %s2 = inlined_call_operand.hbm [shape: f32[8,8,384], index: 2, kind: input, shape index: {}]
  %s3 = inlined_call_operand.hbm [shape: f32[128,384], index: 3, kind: input, shape index: {}]
  %s4 = inlined_call_operand.hbm [shape: f32[128,384], index: 4, kind: input, shape index: {}]
  %s5 = inlined_call_operand.hbm [shape: f32[1,128], index: 5, kind: input, shape index: {}]
  %s6 = inlined_call_operand.hbm [shape: f32[1,128], index: 6, kind: input, shape index: {}]
  %s7 = inlined_call_operand.hbm [shape: f32[8,128], index: 7, kind: output, shape index: {0}]
  %s8 = inlined_call_operand.hbm [shape: f32[8,128], index: 8, kind: output, shape index: {1}]
  %9 = xla_tuple %s7, %s8
  %s10 = sld [smem:[#allocation0]]
  $region105: #{tpu_custom_call.1} parent=0
    _
  %s12 = ssub.s32 1, %s10
  %s13 = scalar_select 0, %s12, %s10
  $region1: #{tpu_custom_call.1} parent=0
    #allocation4 [shape = 'u8[4096]{0}', space=vmem, size = 0x1000, scoped, tag = 'input window, operand 0, single buffered']
    #allocation5 [shape = 's32[2]{0}', space=sflag, size = 0x8, scoped, tag = 'scoped memory for tpu_custom_call.1']
    #allocation6 [shape = 's32[2]{0}', space=sflag, size = 0x8, scoped, tag = 'scoped memory for tpu_custom_call.1']
    #allocation7 [shape = 'u8[98304]{0}', space=vmem, size = 0x18000, scoped, tag = 'input window, operand 1']
    #allocation8 [shape = 's32[2]{0}', space=sflag, size = 0x8, scoped, tag = 'scoped memory for tpu_custom_call.1']
    #allocation9 [shape = 'u8[98304]{0}', space=vmem, size = 0x18000, scoped, tag = 'input window, operand 2']
    #allocation10 [shape = 'u8[196608]{0}', space=vmem, size = 0x30000, scoped, tag = 'input window, operand 3, single buffered']
    #allocation11 [shape = 's32[1]{0}', space=sflag, size = 0x4, scoped, tag = 'scoped memory for tpu_custom_call.1']
    #allocation12 [shape = 'u8[196608]{0}', space=vmem, size = 0x30000, scoped, tag = 'input window, operand 4, single buffered']
    #allocation13 [shape = 'u8[512]{0}', space=vmem, size = 0x400, scoped, tag = 'input window, operand 5, single buffered']
    #allocation14 [shape = 's32[1]{0}', space=sflag, size = 0x4, scoped, tag = 'scoped memory for tpu_custom_call.1']
    #allocation15 [shape = 'u8[512]{0}', space=vmem, size = 0x400, scoped, tag = 'input window, operand 6, single buffered']
    #allocation16 [shape = 'u8[4096]{0}', space=vmem, size = 0x1000, scoped, tag = 'output window, operand 0, single buffered']
    #allocation17 [shape = 'u8[4096]{0}', space=vmem, size = 0x1000, scoped, tag = 'output window, operand 1, single buffered']
    #allocation18 [shape = 's32[1]{0}', space=sflag, size = 0x4, scoped, tag = 'scoped memory for tpu_custom_call.1']
    %14 = vsyncpa [#allocation5], 0
    %15 = vsyncpa [#allocation8], 0
    %s16 = scalar_lea.sflag [#allocation8], 1
    %17 = vsyncpa %s16, 0
    %18 = vsyncpa [#allocation11], 0
    %19 = vsyncpa [#allocation14], 0
    %20 = vsyncpa [#allocation6], 0
    %21 = vsyncpa [#allocation18], 0
    loop: start=0, step=1, limit=4
    $region2: #{tpu_custom_call.1} parent=1 // loop_pre_header
      _
    $region3: #{tpu_custom_call.1} parent=1 // loop_header
      %s23 = sphi 0, %s27
      %p24 = scmp.ge.s32.totalorder %s23, 4
      %s31 = sphi 0, %s31
      %s33 = sphi 0, %s31
      %s34 = sphi 0, %s33
      %s48 = sphi 0, %s34
      %s54 = sphi 0, %s56
      %s57 = sphi 0, %s54
      %s58 = sphi 0, %s57
      %s74 = sphi 0, %s58
      %s82 = sphi 0, %s84
      %s85 = sphi 0, %s82
      %s86 = sphi 0, %s85
      %s102 = sphi 0, %s86
      %s106 = sphi 0, %s106
      %s108 = sphi 0, %s106
      %s109 = sphi 0, %s108
      %s123 = sphi 0, %s109
      %s127 = sphi 0, %s127
      %s129 = sphi 0, %s127
      %s130 = sphi 0, %s129
      %s144 = sphi 0, %s130
      %s148 = sphi 0, %s148
      %s150 = sphi 0, %s148
      %s151 = sphi 0, %s150
      %s165 = sphi 0, %s151
      %s169 = sphi 0, %s169
      %s171 = sphi 0, %s169
      %s172 = sphi 0, %s171
      %s186 = sphi 0, %s172
      %s190 = sphi 0, %s190
      %s192 = sphi 0, %s190
      %s193 = sphi 0, %s192
      %s207 = sphi 0, %s193
      %s211 = sphi 0, %s211
      %s213 = sphi 0, %s211
      %s214 = sphi 0, %s213
      %s228 = sphi 0, %s214
    $region4: #{tpu_custom_call.1} parent=1 // loop_header_branch
      %26 = sbr.rel (%p24) target = $region8
    $region5: #{tpu_custom_call.1} parent=1 // loop_body
      %s28 = ssub.s32 %s23, 1
      %s29 = ssub.s32 %s23, 2
      %s30 = sadd.s32 %s23, 1
      %s32 = sadd.s32 %s31, 1
      %p35 = scmp.eq.s32.totalorder %s23, 1
      %p36 = scmp.ne.s32.totalorder %s31, %s33
      %p37 = scmp.eq.s32.totalorder %s23, 0
      %p38 = por %p36, %p37
      %p39 = scmp.ne.s32.totalorder %s31, %s33
      %p40 = scmp.eq.s32.totalorder %s28, 1
      %p41 = por %p39, %p40
      %p42 = scmp.ne.s32.totalorder %s33, %s34
      %p43 = scmp.eq.s32.totalorder %s28, 0
      %p44 = por %p42, %p43
      %p45 = scmp.ne.s32.totalorder %s33, %s34
      %p46 = scmp.eq.s32.totalorder %s29, 1
      %p47 = por %p45, %p46
      %p49 = scmp.ne.s32.totalorder %s34, %s48
      %p50 = scmp.eq.s32.totalorder %s29, 0
      %p51 = por %p49, %p50
      %s52 = ssub.s32 %s23, %s30
      %p53 = scmp.eq.s32.totalorder %s52, 0
      %s55 = sadd.s32 %s54, 1
      %s56 = scalar_select %p53, %s54, %s55
      %p59 = pneg %p53
      %p60 = scmp.eq.s32.totalorder %s23, 1
      %p61 = por %p59, %p60
      %p62 = scmp.ne.s32.totalorder %s54, %s57
      %p63 = scmp.eq.s32.totalorder %s23, 0
      %p64 = por %p62, %p63
      %p65 = scmp.ne.s32.totalorder %s54, %s57
      %p66 = scmp.eq.s32.totalorder %s28, 1
      %p67 = por %p65, %p66
      %p68 = scmp.ne.s32.totalorder %s57, %s58
      %p69 = scmp.eq.s32.totalorder %s28, 0
      %p70 = por %p68, %p69
      %p71 = scmp.ne.s32.totalorder %s57, %s58
      %p72 = scmp.eq.s32.totalorder %s29, 1
      %p73 = por %p71, %p72
      %p75 = scmp.ne.s32.totalorder %s58, %s74
      %p76 = scmp.eq.s32.totalorder %s29, 0
      %p77 = por %p75, %p76
      %s78 = ssub.s32 1, %s23
      %s79 = ssub.s32 1, %s30
      %s80 = ssub.s32 %s78, %s79
      %p81 = scmp.eq.s32.totalorder %s80, 0
      %s83 = sadd.s32 %s82, 1
      %s84 = scalar_select %p81, %s82, %s83
      %p87 = pneg %p81
      %p88 = scmp.eq.s32.totalorder %s23, 1
      %p89 = por %p87, %p88
      %p90 = scmp.ne.s32.totalorder %s82, %s85
      %p91 = scmp.eq.s32.totalorder %s23, 0
      %p92 = por %p90, %p91
      %p93 = scmp.ne.s32.totalorder %s82, %s85
      %p94 = scmp.eq.s32.totalorder %s28, 1
      %p95 = por %p93, %p94
      %p96 = scmp.ne.s32.totalorder %s85, %s86
      %p97 = scmp.eq.s32.totalorder %s28, 0
      %p98 = por %p96, %p97
      %p99 = scmp.ne.s32.totalorder %s85, %s86
      %p100 = scmp.eq.s32.totalorder %s29, 1
      %p101 = por %p99, %p100
      %p103 = scmp.ne.s32.totalorder %s86, %s102
      %p104 = scmp.eq.s32.totalorder %s29, 0
      %p105 = por %p103, %p104
      %s107 = sadd.s32 %s106, 1
      %p110 = scmp.eq.s32.totalorder %s23, 1
      %p111 = scmp.ne.s32.totalorder %s106, %s108
      %p112 = scmp.eq.s32.totalorder %s23, 0
      %p113 = por %p111, %p112
      %p114 = scmp.ne.s32.totalorder %s106, %s108
      %p115 = scmp.eq.s32.totalorder %s28, 1
      %p116 = por %p114, %p115
      %p117 = scmp.ne.s32.totalorder %s108, %s109
      %p118 = scmp.eq.s32.totalorder %s28, 0
      %p119 = por %p117, %p118
      %p120 = scmp.ne.s32.totalorder %s108, %s109
      %p121 = scmp.eq.s32.totalorder %s29, 1
      %p122 = por %p120, %p121
      %p124 = scmp.ne.s32.totalorder %s109, %s123
      %p125 = scmp.eq.s32.totalorder %s29, 0
      %p126 = por %p124, %p125
      %s128 = sadd.s32 %s127, 1
      %p131 = scmp.eq.s32.totalorder %s23, 1
      %p132 = scmp.ne.s32.totalorder %s127, %s129
      %p133 = scmp.eq.s32.totalorder %s23, 0
      %p134 = por %p132, %p133
      %p135 = scmp.ne.s32.totalorder %s127, %s129
      %p136 = scmp.eq.s32.totalorder %s28, 1
      %p137 = por %p135, %p136
      %p138 = scmp.ne.s32.totalorder %s129, %s130
      %p139 = scmp.eq.s32.totalorder %s28, 0
      %p140 = por %p138, %p139
      %p141 = scmp.ne.s32.totalorder %s129, %s130
      %p142 = scmp.eq.s32.totalorder %s29, 1
      %p143 = por %p141, %p142
      %p145 = scmp.ne.s32.totalorder %s130, %s144
      %p146 = scmp.eq.s32.totalorder %s29, 0
      %p147 = por %p145, %p146
      %s149 = sadd.s32 %s148, 1
      %p152 = scmp.eq.s32.totalorder %s23, 1
      %p153 = scmp.ne.s32.totalorder %s148, %s150
      %p154 = scmp.eq.s32.totalorder %s23, 0
      %p155 = por %p153, %p154
      %p156 = scmp.ne.s32.totalorder %s148, %s150
      %p157 = scmp.eq.s32.totalorder %s28, 1
      %p158 = por %p156, %p157
      %p159 = scmp.ne.s32.totalorder %s150, %s151
      %p160 = scmp.eq.s32.totalorder %s28, 0
      %p161 = por %p159, %p160
      %p162 = scmp.ne.s32.totalorder %s150, %s151
      %p163 = scmp.eq.s32.totalorder %s29, 1
      %p164 = por %p162, %p163
      %p166 = scmp.ne.s32.totalorder %s151, %s165
      %p167 = scmp.eq.s32.totalorder %s29, 0
      %p168 = por %p166, %p167
      %s170 = sadd.s32 %s169, 1
      %p173 = scmp.eq.s32.totalorder %s23, 1
      %p174 = scmp.ne.s32.totalorder %s169, %s171
      %p175 = scmp.eq.s32.totalorder %s23, 0
      %p176 = por %p174, %p175
      %p177 = scmp.ne.s32.totalorder %s169, %s171
      %p178 = scmp.eq.s32.totalorder %s28, 1
      %p179 = por %p177, %p178
      %p180 = scmp.ne.s32.totalorder %s171, %s172
      %p181 = scmp.eq.s32.totalorder %s28, 0
      %p182 = por %p180, %p181
      %p183 = scmp.ne.s32.totalorder %s171, %s172
      %p184 = scmp.eq.s32.totalorder %s29, 1
      %p185 = por %p183, %p184
      %p187 = scmp.ne.s32.totalorder %s172, %s186
      %p188 = scmp.eq.s32.totalorder %s29, 0
      %p189 = por %p187, %p188
      %s191 = sadd.s32 %s190, 1
      %p194 = scmp.eq.s32.totalorder %s23, 1
      %p195 = scmp.ne.s32.totalorder %s190, %s192
      %p196 = scmp.eq.s32.totalorder %s23, 0
      %p197 = por %p195, %p196
      %p198 = scmp.ne.s32.totalorder %s190, %s192
      %p199 = scmp.eq.s32.totalorder %s28, 1
      %p200 = por %p198, %p199
      %p201 = scmp.ne.s32.totalorder %s192, %s193
      %p202 = scmp.eq.s32.totalorder %s28, 0
      %p203 = por %p201, %p202
      %p204 = scmp.ne.s32.totalorder %s192, %s193
      %p205 = scmp.eq.s32.totalorder %s29, 1
      %p206 = por %p204, %p205
      %p208 = scmp.ne.s32.totalorder %s193, %s207
      %p209 = scmp.eq.s32.totalorder %s29, 0
      %p210 = por %p208, %p209
      %s212 = sadd.s32 %s211, 1
      %p215 = scmp.eq.s32.totalorder %s23, 1
      %p216 = scmp.ne.s32.totalorder %s211, %s213
      %p217 = scmp.eq.s32.totalorder %s23, 0
      %p218 = por %p216, %p217
      %p219 = scmp.ne.s32.totalorder %s211, %s213
      %p220 = scmp.eq.s32.totalorder %s28, 1
      %p221 = por %p219, %p220
      %p222 = scmp.ne.s32.totalorder %s213, %s214
      %p223 = scmp.eq.s32.totalorder %s28, 0
      %p224 = por %p222, %p223
      %p225 = scmp.ne.s32.totalorder %s213, %s214
      %p226 = scmp.eq.s32.totalorder %s29, 1
      %p227 = por %p225, %p226
      %p229 = scmp.ne.s32.totalorder %s214, %s228
      %p230 = scmp.eq.s32.totalorder %s29, 0
      %p231 = por %p229, %p230
      %p232 = scmp.le.s32.totalorder 1, %s23
      %p233 = scmp.lt.s32.totalorder %s23, 3
      %p234 = pnand %p232, %p233
      %p235 = pneg %p234
      // Predicated region
      $region9: #{tpu_custom_call.1} parent=5 // pred_check
        _
      $region10: #{tpu_custom_call.1} parent=5 // pred_check_branch
        %237 = sbr.rel (%p234) target = $region12
      $region11: #{tpu_custom_call.1} parent=5 // pred_region
        %s238 = ssub.s32 %s23, 1
        // Predicated region
        $region13: #{tpu_custom_call.1} parent=11 // pred_check
          %p239 = pneg %p44
        $region14: #{tpu_custom_call.1} parent=11 // pred_check_branch
          %241 = sbr.rel (%p239) target = $region16
        $region15: #{tpu_custom_call.1} parent=11 // pred_region
          %s243 = ssub.s32 128, 128
          %244 = vsyncadd [#allocation5], %s243
          %s246 = sshll.u32 [#allocation4], 4
          %s247 = int_to_ptr.vmem [resolvable:$true] %s246
          %249 = dma.hbm_to_vmem [thread:$0]  %s0, 128, %s247, [#allocation5]
        $region16: #{tpu_custom_call.1} parent=11 // pred_fallthru
          _
        // Predicated region
        $region17: #{tpu_custom_call.1} parent=11 // pred_check
          %p250 = pneg %p119
        $region18: #{tpu_custom_call.1} parent=11 // pred_check_branch
          %252 = sbr.rel (%p250) target = $region20
        $region19: #{tpu_custom_call.1} parent=11 // pred_region
          %s254 = ssub.s32 6144, 6144
          %255 = vsyncadd [#allocation11], %s254
          %s256 = sshll.u32 [#allocation10], 4
          %s257 = int_to_ptr.vmem [resolvable:$true] %s256
          %262 = dma.hbm_to_vmem [thread:$0]  %s3, 6144, %s257, [#allocation11], 384, 384, 24
        $region20: #{tpu_custom_call.1} parent=11 // pred_fallthru
          _
        // Predicated region
        $region21: #{tpu_custom_call.1} parent=11 // pred_check
          %p263 = pneg %p140
        $region22: #{tpu_custom_call.1} parent=11 // pred_check_branch
          %265 = sbr.rel (%p263) target = $region24
        $region23: #{tpu_custom_call.1} parent=11 // pred_region
          %s267 = ssub.s32 6144, 6144
          %268 = vsyncadd [#allocation11], %s267
          %s269 = sshll.u32 [#allocation12], 4
          %s270 = int_to_ptr.vmem [resolvable:$true] %s269
          %275 = dma.hbm_to_vmem [thread:$0]  %s4, 6144, %s270, [#allocation11], 384, 384, 24
        $region24: #{tpu_custom_call.1} parent=11 // pred_fallthru
          _
        // Predicated region
        $region25: #{tpu_custom_call.1} parent=11 // pred_check
          %p276 = pneg %p161
        $region26: #{tpu_custom_call.1} parent=11 // pred_check_branch
          %278 = sbr.rel (%p276) target = $region28
        $region27: #{tpu_custom_call.1} parent=11 // pred_region
          %s280 = ssub.s32 16, 16
          %281 = vsyncadd [#allocation14], %s280
          %s283 = sshll.u32 [#allocation13], 4
          %s284 = int_to_ptr.vmem [resolvable:$true] %s283
          %286 = dma.hbm_to_vmem [thread:$0]  %s5, 16, %s284, [#allocation14]
        $region28: #{tpu_custom_call.1} parent=11 // pred_fallthru
          _
        // Predicated region
        $region29: #{tpu_custom_call.1} parent=11 // pred_check
          %p287 = pneg %p182
        $region30: #{tpu_custom_call.1} parent=11 // pred_check_branch
          %289 = sbr.rel (%p287) target = $region32
        $region31: #{tpu_custom_call.1} parent=11 // pred_region
          %s291 = ssub.s32 16, 16
          %292 = vsyncadd [#allocation14], %s291
          %s294 = sshll.u32 [#allocation15], 4
          %s295 = int_to_ptr.vmem [resolvable:$true] %s294
          %297 = dma.hbm_to_vmem [thread:$0]  %s6, 16, %s295, [#allocation14]
        $region32: #{tpu_custom_call.1} parent=11 // pred_fallthru
          _
      $region12: #{tpu_custom_call.1} parent=5 // pred_fallthru
        _
      %p298 = scmp.lt.s32.totalorder %s23, 2
      // Predicated region
      $region33: #{tpu_custom_call.1} parent=5 // pred_check
        %p299 = pneg %p298
      $region34: #{tpu_custom_call.1} parent=5 // pred_check_branch
        %301 = sbr.rel (%p299) target = $region36
      $region35: #{tpu_custom_call.1} parent=5 // pred_region
        // Predicated region
        $region37: #{tpu_custom_call.1} parent=35 // pred_check
          %p302 = pneg %p64
        $region38: #{tpu_custom_call.1} parent=35 // pred_check_branch
          %304 = sbr.rel (%p302) target = $region40
        $region39: #{tpu_custom_call.1} parent=35 // pred_region
          %s305 = sand.u32 %s23, 1
          %s306 = scalar_lea.sflag [#allocation8], %s305
          %s307 = sand.u32 %s54, 1
          %s308 = smul.addr %s307, 96
          %s309 = scalar_lea.vmem [#allocation7], %s308
          %s310 = smul.u32 4, %s23
          %s312 = ssub.s32 1536, 1536
          %313 = vsyncadd %s306, %s312
          %s314 = smul.addr %s310, 3
          %s315 = smul.addr %s314, 128
          %s316 = scalar_lea.hbm %s1, %s315
          %s317 = sshll.u32 %s309, 4
          %s318 = int_to_ptr.vmem [resolvable:$true] %s317
          %323 = dma.hbm_to_vmem [thread:$0]  %s316, 1536, %s318, %s306, 384, 384, 24
        $region40: #{tpu_custom_call.1} parent=35 // pred_fallthru
          _
        // Predicated region
        $region41: #{tpu_custom_call.1} parent=35 // pred_check
          %p324 = pneg %p92
        $region42: #{tpu_custom_call.1} parent=35 // pred_check_branch
          %326 = sbr.rel (%p324) target = $region44
        $region43: #{tpu_custom_call.1} parent=35 // pred_region
          %s327 = sand.u32 %s23, 1
          %s328 = scalar_lea.sflag [#allocation8], %s327
          %s329 = sand.u32 %s82, 1
          %s330 = smul.addr %s329, 96
          %s331 = scalar_lea.vmem [#allocation9], %s330
          %s332 = ssub.s32 1, %s23
          %s333 = smul.u32 4, %s332
          %s335 = ssub.s32 1536, 1536
          %336 = vsyncadd %s328, %s335
          %s337 = smul.addr %s333, 3
          %s338 = smul.addr %s337, 128
          %s339 = scalar_lea.hbm %s2, %s338
          %s340 = sshll.u32 %s331, 4
          %s341 = int_to_ptr.vmem [resolvable:$true] %s340
          %346 = dma.hbm_to_vmem [thread:$0]  %s339, 1536, %s341, %s328, 384, 384, 24
        $region44: #{tpu_custom_call.1} parent=35 // pred_fallthru
          _
      $region36: #{tpu_custom_call.1} parent=5 // pred_fallthru
        _
      %p347 = scmp.le.s32.totalorder 1, %s23
      %p348 = scmp.lt.s32.totalorder %s23, 3
      %p349 = pnand %p347, %p348
      %p350 = pneg %p349
      // Predicated region
      $region45: #{tpu_custom_call.1} parent=5 // pred_check
        _
      $region46: #{tpu_custom_call.1} parent=5 // pred_check_branch
        %352 = sbr.rel (%p349) target = $region48
      $region47: #{tpu_custom_call.1} parent=5 // pred_region
        %s353 = ssub.s32 %s23, 1
        // Predicated region
        $region49: #{tpu_custom_call.1} parent=47 // pred_check
          %p354 = pneg %p44
        $region50: #{tpu_custom_call.1} parent=47 // pred_check_branch
          %356 = sbr.rel (%p354) target = $region52
        $region51: #{tpu_custom_call.1} parent=47 // pred_region
          %357 = dma.done [#allocation5], 128
        $region52: #{tpu_custom_call.1} parent=47 // pred_fallthru
          _
        %s358 = sand.u32 %s28, 1
        %s359 = scalar_lea.sflag [#allocation8], %s358
        %s360 = sand.u32 %s57, 1
        %s361 = smul.addr %s360, 96
        %s362 = scalar_lea.vmem [#allocation7], %s361
        // Predicated region
        $region53: #{tpu_custom_call.1} parent=47 // pred_check
          %p363 = pneg %p70
        $region54: #{tpu_custom_call.1} parent=47 // pred_check_branch
          %365 = sbr.rel (%p363) target = $region56
        $region55: #{tpu_custom_call.1} parent=47 // pred_region
          %366 = dma.done %s359, 1536
        $region56: #{tpu_custom_call.1} parent=47 // pred_fallthru
          _
        %s367 = sand.u32 %s28, 1
        %s368 = scalar_lea.sflag [#allocation8], %s367
        %s369 = sand.u32 %s85, 1
        %s370 = smul.addr %s369, 96
        %s371 = scalar_lea.vmem [#allocation9], %s370
        // Predicated region
        $region57: #{tpu_custom_call.1} parent=47 // pred_check
          %p372 = pneg %p98
        $region58: #{tpu_custom_call.1} parent=47 // pred_check_branch
          %374 = sbr.rel (%p372) target = $region60
        $region59: #{tpu_custom_call.1} parent=47 // pred_region
          %375 = dma.done %s368, 1536
        $region60: #{tpu_custom_call.1} parent=47 // pred_fallthru
          _
        // Predicated region
        $region61: #{tpu_custom_call.1} parent=47 // pred_check
          %p376 = pneg %p119
        $region62: #{tpu_custom_call.1} parent=47 // pred_check_branch
          %378 = sbr.rel (%p376) target = $region64
        $region63: #{tpu_custom_call.1} parent=47 // pred_region
          %379 = dma.done [#allocation11], 6144
        $region64: #{tpu_custom_call.1} parent=47 // pred_fallthru
          _
        // Predicated region
        $region65: #{tpu_custom_call.1} parent=47 // pred_check
          %p380 = pneg %p140
        $region66: #{tpu_custom_call.1} parent=47 // pred_check_branch
          %382 = sbr.rel (%p380) target = $region68
        $region67: #{tpu_custom_call.1} parent=47 // pred_region
          %383 = dma.done [#allocation11], 6144
        $region68: #{tpu_custom_call.1} parent=47 // pred_fallthru
          _
        // Predicated region
        $region69: #{tpu_custom_call.1} parent=47 // pred_check
          %p384 = pneg %p161
        $region70: #{tpu_custom_call.1} parent=47 // pred_check_branch
          %386 = sbr.rel (%p384) target = $region72
        $region71: #{tpu_custom_call.1} parent=47 // pred_region
          %387 = dma.done [#allocation14], 16
        $region72: #{tpu_custom_call.1} parent=47 // pred_fallthru
          _
        // Predicated region
        $region73: #{tpu_custom_call.1} parent=47 // pred_check
          %p388 = pneg %p182
        $region74: #{tpu_custom_call.1} parent=47 // pred_check_branch
          %390 = sbr.rel (%p388) target = $region76
        $region75: #{tpu_custom_call.1} parent=47 // pred_region
          %391 = dma.done [#allocation14], 16
        $region76: #{tpu_custom_call.1} parent=47 // pred_fallthru
          _
        %p392 = pneg %p44
        %p393 = pneg %p41
        %s394 = sand.u32 %s28, 1
        %s395 = scalar_lea.sflag [#allocation8], %s394
        %s396 = sand.u32 %s57, 1
        %s397 = smul.addr %s396, 96
        %s398 = scalar_lea.vmem [#allocation7], %s397
        %p399 = pneg %p70
        %p400 = pneg %p67
        %s401 = sand.u32 %s28, 1
        %s402 = scalar_lea.sflag [#allocation8], %s401
        %s403 = sand.u32 %s85, 1
        %s404 = smul.addr %s403, 96
        %s405 = scalar_lea.vmem [#allocation9], %s404
        %p406 = pneg %p98
        %p407 = pneg %p95
        %p408 = pneg %p119
        %p409 = pneg %p116
        %p410 = pneg %p140
        %p411 = pneg %p137
        %p412 = pneg %p161
        %p413 = pneg %p158
        %p414 = pneg %p182
        %p415 = pneg %p179
        %p416 = pneg %p203
        %p417 = pneg %p200
        %p418 = pneg %p224
        %p419 = pneg %p221
        %s420 = smul.u32 4, %s28
        %s421 = ssub.s32 1, %s28
        %s422 = smul.u32 4, %s421
        %p423 = scmp.eq.s32.totalorder %s28, 0
        // Predicated region
        $region77: #{tpu_custom_call.1} parent=47 // pred_check
          %p424 = pneg %p423
        $region78: #{tpu_custom_call.1} parent=47 // pred_check_branch
          %426 = sbr.rel (%p424) target = $region80
        $region79: #{tpu_custom_call.1} parent=47 // pred_region
          %427 = vst [vmem:[#allocation2] sm:$0xff] 0.0
          %428 = vst [vmem:[#allocation3] sm:$0xff] 0.0
        $region80: #{tpu_custom_call.1} parent=47 // pred_fallthru
          _
        %v429 = vld [vmem:[#allocation4] sm:$0xff]
        %v430 = vld [vmem:[#allocation10] sm:$0xff]
        %v431 = vld [vmem:[#allocation10 + $0x8] sm:$0xff]
        %v432 = vld [vmem:[#allocation10 + $0x10] sm:$0xff]
        %v433 = vld [vmem:[#allocation10 + $0x18] sm:$0xff]
        %v434 = vld [vmem:[#allocation10 + $0x20] sm:$0xff]
        %v435 = vld [vmem:[#allocation10 + $0x28] sm:$0xff]
        %v436 = vld [vmem:[#allocation10 + $0x30] sm:$0xff]
        %v437 = vld [vmem:[#allocation10 + $0x38] sm:$0xff]
        %v438 = vld [vmem:[#allocation10 + $0x40] sm:$0xff]
        %v439 = vld [vmem:[#allocation10 + $0x48] sm:$0xff]
        %v440 = vld [vmem:[#allocation10 + $0x50] sm:$0xff]
        %v441 = vld [vmem:[#allocation10 + $0x58] sm:$0xff]
        %v442 = vld [vmem:[#allocation10 + $0x60] sm:$0xff]
        %v443 = vld [vmem:[#allocation10 + $0x68] sm:$0xff]
        %v444 = vld [vmem:[#allocation10 + $0x70] sm:$0xff]
        %v445 = vld [vmem:[#allocation10 + $0x78] sm:$0xff]
        %v446 = vld [vmem:[#allocation10 + $0x80] sm:$0xff]
        %v447 = vld [vmem:[#allocation10 + $0x88] sm:$0xff]
        %v448 = vld [vmem:[#allocation10 + $0x90] sm:$0xff]
        %v449 = vld [vmem:[#allocation10 + $0x98] sm:$0xff]
        %v450 = vld [vmem:[#allocation10 + $0xa0] sm:$0xff]
        %v451 = vld [vmem:[#allocation10 + $0xa8] sm:$0xff]
        %v452 = vld [vmem:[#allocation10 + $0xb0] sm:$0xff]
        %v453 = vld [vmem:[#allocation10 + $0xb8] sm:$0xff]
        %v454 = vld [vmem:[#allocation10 + $0xc0] sm:$0xff]
        %v455 = vld [vmem:[#allocation10 + $0xc8] sm:$0xff]
        %v456 = vld [vmem:[#allocation10 + $0xd0] sm:$0xff]
        %v457 = vld [vmem:[#allocation10 + $0xd8] sm:$0xff]
        %v458 = vld [vmem:[#allocation10 + $0xe0] sm:$0xff]
        %v459 = vld [vmem:[#allocation10 + $0xe8] sm:$0xff]
        %v460 = vld [vmem:[#allocation10 + $0xf0] sm:$0xff]
        %v461 = vld [vmem:[#allocation10 + $0xf8] sm:$0xff]
        %v462 = vld [vmem:[#allocation10 + $0x100] sm:$0xff]
        %v463 = vld [vmem:[#allocation10 + $0x108] sm:$0xff]
        %v464 = vld [vmem:[#allocation10 + $0x110] sm:$0xff]
        %v465 = vld [vmem:[#allocation10 + $0x118] sm:$0xff]
        %v466 = vld [vmem:[#allocation10 + $0x120] sm:$0xff]
        %v467 = vld [vmem:[#allocation10 + $0x128] sm:$0xff]
        %v468 = vld [vmem:[#allocation10 + $0x130] sm:$0xff]
        %v469 = vld [vmem:[#allocation10 + $0x138] sm:$0xff]
        %v470 = vld [vmem:[#allocation10 + $0x140] sm:$0xff]
        %v471 = vld [vmem:[#allocation10 + $0x148] sm:$0xff]
        %v472 = vld [vmem:[#allocation10 + $0x150] sm:$0xff]
        %v473 = vld [vmem:[#allocation10 + $0x158] sm:$0xff]
        %v474 = vld [vmem:[#allocation10 + $0x160] sm:$0xff]
        %v475 = vld [vmem:[#allocation10 + $0x168] sm:$0xff]
        %v476 = vld [vmem:[#allocation10 + $0x170] sm:$0xff]
        %v477 = vld [vmem:[#allocation10 + $0x178] sm:$0xff]
        %v478 = vld [vmem:[#allocation12] sm:$0xff]
        %v479 = vld [vmem:[#allocation12 + $0x8] sm:$0xff]
        %v480 = vld [vmem:[#allocation12 + $0x10] sm:$0xff]
        %v481 = vld [vmem:[#allocation12 + $0x18] sm:$0xff]
        %v482 = vld [vmem:[#allocation12 + $0x20] sm:$0xff]
        %v483 = vld [vmem:[#allocation12 + $0x28] sm:$0xff]
        %v484 = vld [vmem:[#allocation12 + $0x30] sm:$0xff]
        %v485 = vld [vmem:[#allocation12 + $0x38] sm:$0xff]
        %v486 = vld [vmem:[#allocation12 + $0x40] sm:$0xff]
        %v487 = vld [vmem:[#allocation12 + $0x48] sm:$0xff]
        %v488 = vld [vmem:[#allocation12 + $0x50] sm:$0xff]
        %v489 = vld [vmem:[#allocation12 + $0x58] sm:$0xff]
        %v490 = vld [vmem:[#allocation12 + $0x60] sm:$0xff]
        %v491 = vld [vmem:[#allocation12 + $0x68] sm:$0xff]
        %v492 = vld [vmem:[#allocation12 + $0x70] sm:$0xff]
        %v493 = vld [vmem:[#allocation12 + $0x78] sm:$0xff]
        %v494 = vld [vmem:[#allocation12 + $0x80] sm:$0xff]
        %v495 = vld [vmem:[#allocation12 + $0x88] sm:$0xff]
        %v496 = vld [vmem:[#allocation12 + $0x90] sm:$0xff]
        %v497 = vld [vmem:[#allocation12 + $0x98] sm:$0xff]
        %v498 = vld [vmem:[#allocation12 + $0xa0] sm:$0xff]
        %v499 = vld [vmem:[#allocation12 + $0xa8] sm:$0xff]
        %v500 = vld [vmem:[#allocation12 + $0xb0] sm:$0xff]
        %v501 = vld [vmem:[#allocation12 + $0xb8] sm:$0xff]
        %v502 = vld [vmem:[#allocation12 + $0xc0] sm:$0xff]
        %v503 = vld [vmem:[#allocation12 + $0xc8] sm:$0xff]
        %v504 = vld [vmem:[#allocation12 + $0xd0] sm:$0xff]
        %v505 = vld [vmem:[#allocation12 + $0xd8] sm:$0xff]
        %v506 = vld [vmem:[#allocation12 + $0xe0] sm:$0xff]
        %v507 = vld [vmem:[#allocation12 + $0xe8] sm:$0xff]
        %v508 = vld [vmem:[#allocation12 + $0xf0] sm:$0xff]
        %v509 = vld [vmem:[#allocation12 + $0xf8] sm:$0xff]
        %v510 = vld [vmem:[#allocation12 + $0x100] sm:$0xff]
        %v511 = vld [vmem:[#allocation12 + $0x108] sm:$0xff]
        %v512 = vld [vmem:[#allocation12 + $0x110] sm:$0xff]
        %v513 = vld [vmem:[#allocation12 + $0x118] sm:$0xff]
        %v514 = vld [vmem:[#allocation12 + $0x120] sm:$0xff]
        %v515 = vld [vmem:[#allocation12 + $0x128] sm:$0xff]
        %v516 = vld [vmem:[#allocation12 + $0x130] sm:$0xff]
        %v517 = vld [vmem:[#allocation12 + $0x138] sm:$0xff]
        %v518 = vld [vmem:[#allocation12 + $0x140] sm:$0xff]
        %v519 = vld [vmem:[#allocation12 + $0x148] sm:$0xff]
        %v520 = vld [vmem:[#allocation12 + $0x150] sm:$0xff]
        %v521 = vld [vmem:[#allocation12 + $0x158] sm:$0xff]
        %v522 = vld [vmem:[#allocation12 + $0x160] sm:$0xff]
        %v523 = vld [vmem:[#allocation12 + $0x168] sm:$0xff]
        %v524 = vld [vmem:[#allocation12 + $0x170] sm:$0xff]
        %v525 = vld [vmem:[#allocation12 + $0x178] sm:$0xff]
        %v526 = vld [vmem:[#allocation13] sm:$0x1]
        %v527 = vld [vmem:[#allocation15] sm:$0x1]
        %s528 = smul.u32 %s28, 4
        %s529 = ssub.s32 1, %s28
        %s530 = smul.u32 %s529, 4
        %v531 = vld [vmem:[#allocation2] sm:$0xff]
        %v532 = vld [vmem:[#allocation3] sm:$0xff]
        %v533 = vstv %s528
        %vm534 = vcmp.gt.s32.totalorder %v429, %v533
        %v535 = vsel %vm534, 1, 0
        %v536 = vcvt.s32.f32 %v535
        %s537 = sadd.s32 %s530, 3
        %v538 = vstv %s537
        %vm539 = vcmp.gt.s32.totalorder %v429, %v538
        %v540 = vsel %vm539, 1, 0
        %v541 = vcvt.s32.f32 %v540
        %v542 = vld [vmem:[%s362] sm:$0xff]
        %v543 = vld [vmem:[%s362 + $0x8] sm:$0xff]
        %v544 = vld [vmem:[%s362 + $0x10] sm:$0xff]
        %545 = vmatprep.subr.mxu0 %v431
        %546 = vmatpush1.msra.mxu0 %v430
        %547 = vmatprep.subr.mxu0 %v434
        %548 = vmatpush1.msra.mxu0 %v433
        %549 = vmatprep.subr.mxu0 %v437
        %550 = vmatpush1.msra.mxu0 %v436
        %551 = vmatprep.subr.mxu0 %v440
        %552 = vmatpush1.msra.mxu0 %v439
        %553 = vmatprep.subr.mxu0 %v443
        %554 = vmatpush1.msra.mxu0 %v442
        %555 = vmatprep.subr.mxu0 %v446
        %556 = vmatpush1.msra.mxu0 %v445
        %557 = vmatprep.subr.mxu0 %v449
        %558 = vmatpush1.msra.mxu0 %v448
        %559 = vmatprep.subr.mxu0 %v452
        %560 = vmatpush1.msra.mxu0 %v451
        %561 = vmatprep.subr.mxu0 %v455
        %562 = vmatpush1.msra.mxu0 %v454
        %563 = vmatprep.subr.mxu0 %v458
        %564 = vmatpush1.msra.mxu0 %v457
        %565 = vmatprep.subr.mxu0 %v461
        %566 = vmatpush1.msra.mxu0 %v460
        %567 = vmatprep.subr.mxu0 %v464
        %568 = vmatpush1.msra.mxu0 %v463
        %569 = vmatprep.subr.mxu0 %v467
        %570 = vmatpush1.msra.mxu0 %v466
        %571 = vmatprep.subr.mxu0 %v470
        %572 = vmatpush1.msra.mxu0 %v469
        %573 = vmatprep.subr.mxu0 %v473
        %574 = vmatpush1.msra.mxu0 %v472
        %575 = vmatprep.subr.mxu0 %v476
        %576 = vmatpush1.msra.mxu0 %v475
        %577 = vmatprep.subr.mxu0 0.0
        %578 = vmatpush1.msra.mxu0 0.0
        %579 = vmatprep.subr.mxu0 0.0
        %580 = vmatpush1.msra.mxu0 0.0
        %581 = vmatprep.subr.mxu0 0.0
        %582 = vmatpush1.msra.mxu0 0.0
        %583 = vmatprep.subr.mxu0 0.0
        %584 = vmatpush1.msra.mxu0 0.0
        %585 = vmatprep.subr.mxu0 0.0
        %586 = vmatpush1.msra.mxu0 0.0
        %587 = vmatprep.subr.mxu0 0.0
        %588 = vmatpush1.msra.mxu0 0.0
        %589 = vmatprep.subr.mxu0 0.0
        %590 = vmatpush1.msra.mxu0 0.0
        %591 = vmatprep.subr.mxu0 0.0
        %592 = vmatpush1.msra.mxu0 0.0
        %593 = vmatprep.subr.mxu0 0.0
        %594 = vmatpush1.msra.mxu0 0.0
        %595 = vmatprep.subr.mxu0 0.0
        %596 = vmatpush1.msra.mxu0 0.0
        %597 = vmatprep.subr.mxu0 0.0
        %598 = vmatpush1.msra.mxu0 0.0
        %599 = vmatprep.subr.mxu0 0.0
        %600 = vmatpush1.msra.mxu0 0.0
        %601 = vmatprep.subr.mxu0 0.0
        %602 = vmatpush1.msra.mxu0 0.0
        %603 = vmatprep.subr.mxu0 0.0
        %604 = vmatpush1.msra.mxu0 0.0
        %605 = vmatprep.subr.mxu0 0.0
        %606 = vmatpush1.msra.mxu0 0.0
        %607 = vmatprep.subr.mxu0 0.0
        %608 = vmatpush1.msra.mxu0 0.0
        %609 = vmatprep.mubr.f32.mxu0 0.0
        %610 = vmatmul.mubr.f32.gmra.mrb[0].mxu0 %v531
        %v611 = vpop.f32.mrb[0].mxu0
        %v612 = vadd.f32 0.0, %v611
        %v613 = vpop.f32.mrb[0].mxu0
        %v614 = vadd.f32 0.0, %v613
        %615 = vdwg.mxu0
        %616 = vmatprep.subr.mxu0 0.0
        %617 = vmatpush1.msra.mxu0 %v432
        %618 = vmatprep.subr.mxu0 0.0
        %619 = vmatpush1.msra.mxu0 %v435
        %620 = vmatprep.subr.mxu0 0.0
        %621 = vmatpush1.msra.mxu0 %v438
        %622 = vmatprep.subr.mxu0 0.0
        %623 = vmatpush1.msra.mxu0 %v441
        %624 = vmatprep.subr.mxu0 0.0
        %625 = vmatpush1.msra.mxu0 %v444
        %626 = vmatprep.subr.mxu0 0.0
        %627 = vmatpush1.msra.mxu0 %v447
        %628 = vmatprep.subr.mxu0 0.0
        %629 = vmatpush1.msra.mxu0 %v450
        %630 = vmatprep.subr.mxu0 0.0
        %631 = vmatpush1.msra.mxu0 %v453
        %632 = vmatprep.subr.mxu0 0.0
        %633 = vmatpush1.msra.mxu0 %v456
        %634 = vmatprep.subr.mxu0 0.0
        %635 = vmatpush1.msra.mxu0 %v459
        %636 = vmatprep.subr.mxu0 0.0
        %637 = vmatpush1.msra.mxu0 %v462
        %638 = vmatprep.subr.mxu0 0.0
        %639 = vmatpush1.msra.mxu0 %v465
        %640 = vmatprep.subr.mxu0 0.0
        %641 = vmatpush1.msra.mxu0 %v468
        %642 = vmatprep.subr.mxu0 0.0
        %643 = vmatpush1.msra.mxu0 %v471
        %644 = vmatprep.subr.mxu0 0.0
        %645 = vmatpush1.msra.mxu0 %v474
        %646 = vmatprep.subr.mxu0 0.0
        %647 = vmatpush1.msra.mxu0 %v477
        %648 = vmatprep.subr.mxu0 0.0
        %649 = vmatpush1.msra.mxu0 0.0
        %650 = vmatprep.subr.mxu0 0.0
        %651 = vmatpush1.msra.mxu0 0.0
        %652 = vmatprep.subr.mxu0 0.0
        %653 = vmatpush1.msra.mxu0 0.0
        %654 = vmatprep.subr.mxu0 0.0
        %655 = vmatpush1.msra.mxu0 0.0
        %656 = vmatprep.subr.mxu0 0.0
        %657 = vmatpush1.msra.mxu0 0.0
        %658 = vmatprep.subr.mxu0 0.0
        %659 = vmatpush1.msra.mxu0 0.0
        %660 = vmatprep.subr.mxu0 0.0
        %661 = vmatpush1.msra.mxu0 0.0
        %662 = vmatprep.subr.mxu0 0.0
        %663 = vmatpush1.msra.mxu0 0.0
        %664 = vmatprep.subr.mxu0 0.0
        %665 = vmatpush1.msra.mxu0 0.0
        %666 = vmatprep.subr.mxu0 0.0
        %667 = vmatpush1.msra.mxu0 0.0
        %668 = vmatprep.subr.mxu0 0.0
        %669 = vmatpush1.msra.mxu0 0.0
        %670 = vmatprep.subr.mxu0 0.0
        %671 = vmatpush1.msra.mxu0 0.0
        %672 = vmatprep.subr.mxu0 0.0
        %673 = vmatpush1.msra.mxu0 0.0
        %674 = vmatprep.subr.mxu0 0.0
        %675 = vmatpush1.msra.mxu0 0.0
        %676 = vmatprep.subr.mxu0 0.0
        %677 = vmatpush1.msra.mxu0 0.0
        %678 = vmatprep.subr.mxu0 0.0
        %679 = vmatpush1.msra.mxu0 0.0
        %680 = vmatprep.mubr.f32.mxu0 0.0
        %681 = vmatmul.mubr.f32.gmra.mrb[0].mxu0 %v531
        %v682 = vpop.f32.mrb[0].mxu0
        %v683 = vadd.f32 0.0, %v682
        %v684 = vpop.f32.mrb[0].mxu0
        %685 = vdwg.mxu0
        %v686 = vadd.f32 %v542, %v612
        %v687 = vxor.u32 %v686, 2147483648
        %v688 = vmul.f32 %v687, 1.442695
        %v689 = vpow.pop %v688
        %v690 = vadd.f32 %v689, 1.0
        %v691 = vrcp.pop %v690
        %v692 = vmul.f32 1.0, %v691
        %v693 = vadd.f32 %v543, %v614
        %v694 = vxor.u32 %v693, 2147483648
        %v695 = vmul.f32 %v694, 1.442695
        %v696 = vpow.pop %v695
        %v697 = vadd.f32 %v696, 1.0
        %v698 = vrcp.pop %v697
        %v699 = vmul.f32 1.0, %v698
        %v701 = vlaneseq
        %v702 = vshrl.u32 %v701, 7
        %v703 = vsub.s32 0, %v702
        %v704 = vrot.slane %v526, %v703
        %v706 = vadd.f32 %v683, %v704
        %v707 = vmul.f32 %v692, %v706
        %v708 = vadd.f32 %v544, %v707
        %v709 = vtanh.pop %v708
        %v710 = vsub.f32 1.0, %v699
        %v711 = vmul.f32 %v710, %v709
        %v712 = vmul.f32 %v699, %v531
        %v713 = vadd.f32 %v711, %v712
        %s714 = scalar_lea.vmem %s371, 72 [#allocation9]
        %v715 = vld [vmem:[%s714] sm:$0xff]
        %v716 = vld [vmem:[%s714 + $0x8] sm:$0xff]
        %v717 = vld [vmem:[%s714 + $0x10] sm:$0xff]
        %718 = vmatprep.subr.mxu0 %v479
        %719 = vmatpush1.msra.mxu0 %v478
        %720 = vmatprep.subr.mxu0 %v482
        %721 = vmatpush1.msra.mxu0 %v481
        %722 = vmatprep.subr.mxu0 %v485
        %723 = vmatpush1.msra.mxu0 %v484
        %724 = vmatprep.subr.mxu0 %v488
        %725 = vmatpush1.msra.mxu0 %v487
        %726 = vmatprep.subr.mxu0 %v491
        %727 = vmatpush1.msra.mxu0 %v490
        %728 = vmatprep.subr.mxu0 %v494
        %729 = vmatpush1.msra.mxu0 %v493
        %730 = vmatprep.subr.mxu0 %v497
        %731 = vmatpush1.msra.mxu0 %v496
        %732 = vmatprep.subr.mxu0 %v500
        %733 = vmatpush1.msra.mxu0 %v499
        %734 = vmatprep.subr.mxu0 %v503
        %735 = vmatpush1.msra.mxu0 %v502
        %736 = vmatprep.subr.mxu0 %v506
        %737 = vmatpush1.msra.mxu0 %v505
        %738 = vmatprep.subr.mxu0 %v509
        %739 = vmatpush1.msra.mxu0 %v508
        %740 = vmatprep.subr.mxu0 %v512
        %741 = vmatpush1.msra.mxu0 %v511
        %742 = vmatprep.subr.mxu0 %v515
        %743 = vmatpush1.msra.mxu0 %v514
        %744 = vmatprep.subr.mxu0 %v518
        %745 = vmatpush1.msra.mxu0 %v517
        %746 = vmatprep.subr.mxu0 %v521
        %747 = vmatpush1.msra.mxu0 %v520
        %748 = vmatprep.subr.mxu0 %v524
        %749 = vmatpush1.msra.mxu0 %v523
        %750 = vmatprep.subr.mxu0 0.0
        %751 = vmatpush1.msra.mxu0 0.0
        %752 = vmatprep.subr.mxu0 0.0
        %753 = vmatpush1.msra.mxu0 0.0
        %754 = vmatprep.subr.mxu0 0.0
        %755 = vmatpush1.msra.mxu0 0.0
        %756 = vmatprep.subr.mxu0 0.0
        %757 = vmatpush1.msra.mxu0 0.0
        %758 = vmatprep.subr.mxu0 0.0
        %759 = vmatpush1.msra.mxu0 0.0
        %760 = vmatprep.subr.mxu0 0.0
        %761 = vmatpush1.msra.mxu0 0.0
        %762 = vmatprep.subr.mxu0 0.0
        %763 = vmatpush1.msra.mxu0 0.0
        %764 = vmatprep.subr.mxu0 0.0
        %765 = vmatpush1.msra.mxu0 0.0
        %766 = vmatprep.subr.mxu0 0.0
        %767 = vmatpush1.msra.mxu0 0.0
        %768 = vmatprep.subr.mxu0 0.0
        %769 = vmatpush1.msra.mxu0 0.0
        %770 = vmatprep.subr.mxu0 0.0
        %771 = vmatpush1.msra.mxu0 0.0
        %772 = vmatprep.subr.mxu0 0.0
        %773 = vmatpush1.msra.mxu0 0.0
        %774 = vmatprep.subr.mxu0 0.0
        %775 = vmatpush1.msra.mxu0 0.0
        %776 = vmatprep.subr.mxu0 0.0
        %777 = vmatpush1.msra.mxu0 0.0
        %778 = vmatprep.subr.mxu0 0.0
        %779 = vmatpush1.msra.mxu0 0.0
        %780 = vmatprep.subr.mxu0 0.0
        %781 = vmatpush1.msra.mxu0 0.0
        %782 = vmatprep.mubr.f32.mxu0 0.0
        %783 = vmatmul.mubr.f32.gmra.mrb[0].mxu0 %v532
        %v784 = vpop.f32.mrb[0].mxu0
        %v785 = vadd.f32 0.0, %v784
        %v786 = vpop.f32.mrb[0].mxu0
        %v787 = vadd.f32 0.0, %v786
        %788 = vdwg.mxu0
        %789 = vmatprep.subr.mxu0 0.0
        %790 = vmatpush1.msra.mxu0 %v480
        %791 = vmatprep.subr.mxu0 0.0
        %792 = vmatpush1.msra.mxu0 %v483
        %793 = vmatprep.subr.mxu0 0.0
        %794 = vmatpush1.msra.mxu0 %v486
        %795 = vmatprep.subr.mxu0 0.0
        %796 = vmatpush1.msra.mxu0 %v489
        %797 = vmatprep.subr.mxu0 0.0
        %798 = vmatpush1.msra.mxu0 %v492
        %799 = vmatprep.subr.mxu0 0.0
        %800 = vmatpush1.msra.mxu0 %v495
        %801 = vmatprep.subr.mxu0 0.0
        %802 = vmatpush1.msra.mxu0 %v498
        %803 = vmatprep.subr.mxu0 0.0
        %804 = vmatpush1.msra.mxu0 %v501
        %805 = vmatprep.subr.mxu0 0.0
        %806 = vmatpush1.msra.mxu0 %v504
        %807 = vmatprep.subr.mxu0 0.0
        %808 = vmatpush1.msra.mxu0 %v507
        %809 = vmatprep.subr.mxu0 0.0
        %810 = vmatpush1.msra.mxu0 %v510
        %811 = vmatprep.subr.mxu0 0.0
        %812 = vmatpush1.msra.mxu0 %v513
        %813 = vmatprep.subr.mxu0 0.0
        %814 = vmatpush1.msra.mxu0 %v516
        %815 = vmatprep.subr.mxu0 0.0
        %816 = vmatpush1.msra.mxu0 %v519
        %817 = vmatprep.subr.mxu0 0.0
        %818 = vmatpush1.msra.mxu0 %v522
        %819 = vmatprep.subr.mxu0 0.0
        %820 = vmatpush1.msra.mxu0 %v525
        %821 = vmatprep.subr.mxu0 0.0
        %822 = vmatpush1.msra.mxu0 0.0
        %823 = vmatprep.subr.mxu0 0.0
        %824 = vmatpush1.msra.mxu0 0.0
        %825 = vmatprep.subr.mxu0 0.0
        %826 = vmatpush1.msra.mxu0 0.0
        %827 = vmatprep.subr.mxu0 0.0
        %828 = vmatpush1.msra.mxu0 0.0
        %829 = vmatprep.subr.mxu0 0.0
        %830 = vmatpush1.msra.mxu0 0.0
        %831 = vmatprep.subr.mxu0 0.0
        %832 = vmatpush1.msra.mxu0 0.0
        %833 = vmatprep.subr.mxu0 0.0
        %834 = vmatpush1.msra.mxu0 0.0
        %835 = vmatprep.subr.mxu0 0.0
        %836 = vmatpush1.msra.mxu0 0.0
        %837 = vmatprep.subr.mxu0 0.0
        %838 = vmatpush1.msra.mxu0 0.0
        %839 = vmatprep.subr.mxu0 0.0
        %840 = vmatpush1.msra.mxu0 0.0
        %841 = vmatprep.subr.mxu0 0.0
        %842 = vmatpush1.msra.mxu0 0.0
        %843 = vmatprep.subr.mxu0 0.0
        %844 = vmatpush1.msra.mxu0 0.0
        %845 = vmatprep.subr.mxu0 0.0
        %846 = vmatpush1.msra.mxu0 0.0
        %847 = vmatprep.subr.mxu0 0.0
        %848 = vmatpush1.msra.mxu0 0.0
        %849 = vmatprep.subr.mxu0 0.0
        %850 = vmatpush1.msra.mxu0 0.0
        %851 = vmatprep.subr.mxu0 0.0
        %852 = vmatpush1.msra.mxu0 0.0
        %853 = vmatprep.mubr.f32.mxu0 0.0
        %854 = vmatmul.mubr.f32.gmra.mrb[0].mxu0 %v532
        %v855 = vpop.f32.mrb[0].mxu0
        %v856 = vadd.f32 0.0, %v855
        %v857 = vpop.f32.mrb[0].mxu0
        %858 = vdwg.mxu0
        %v859 = vadd.f32 %v715, %v785
        %v860 = vxor.u32 %v859, 2147483648
        %v861 = vmul.f32 %v860, 1.442695
        %v862 = vpow.pop %v861
        %v863 = vadd.f32 %v862, 1.0
        %v864 = vrcp.pop %v863
        %v865 = vmul.f32 1.0, %v864
        %v866 = vadd.f32 %v716, %v787
        %v867 = vxor.u32 %v866, 2147483648
        %v868 = vmul.f32 %v867, 1.442695
        %v869 = vpow.pop %v868
        %v870 = vadd.f32 %v869, 1.0
        %v871 = vrcp.pop %v870
        %v872 = vmul.f32 1.0, %v871
        %v874 = vlaneseq
        %v875 = vshrl.u32 %v874, 7
        %v876 = vsub.s32 0, %v875
        %v877 = vrot.slane %v527, %v876
        %v879 = vadd.f32 %v856, %v877
        %v880 = vmul.f32 %v865, %v879
        %v881 = vadd.f32 %v717, %v880
        %v882 = vtanh.pop %v881
        %v883 = vsub.f32 1.0, %v872
        %v884 = vmul.f32 %v883, %v882
        %v885 = vmul.f32 %v872, %v532
        %v886 = vadd.f32 %v884, %v885
        %888 = vset.pattern.permute.xlu0 0
        %889 = vperm.xlu0 %888, %v536
        %v890 = vpop.permute.xlu0 %889
        %v892 = vmul.f32 %v890, %v713
        %v893 = vsub.f32 1.0, %v536
        %895 = vset.pattern.permute.xlu0 0
        %896 = vperm.xlu0 %895, %v893
        %v897 = vpop.permute.xlu0 %896
        %v899 = vmul.f32 %v897, %v531
        %v900 = vadd.f32 %v892, %v899
        %902 = vset.pattern.permute.xlu0 0
        %903 = vperm.xlu0 %902, %v541
        %v904 = vpop.permute.xlu0 %903
        %v906 = vmul.f32 %v904, %v886
        %v907 = vsub.f32 1.0, %v541
        %909 = vset.pattern.permute.xlu0 0
        %910 = vperm.xlu0 %909, %v907
        %v911 = vpop.permute.xlu0 %910
        %v913 = vmul.f32 %v911, %v532
        %v914 = vadd.f32 %v906, %v913
        %s915 = sadd.s32 %s528, 1
        %v916 = vstv %s915
        %vm917 = vcmp.gt.s32.totalorder %v429, %v916
        %v918 = vsel %vm917, 1, 0
        %v919 = vcvt.s32.f32 %v918
        %s920 = sadd.s32 %s530, 2
        %v921 = vstv %s920
        %vm922 = vcmp.gt.s32.totalorder %v429, %v921
        %v923 = vsel %vm922, 1, 0
        %v924 = vcvt.s32.f32 %v923
        %s925 = scalar_lea.vmem %s362, 24 [#allocation7]
        %v926 = vld [vmem:[%s925] sm:$0xff]
        %v927 = vld [vmem:[%s925 + $0x8] sm:$0xff]
        %v928 = vld [vmem:[%s925 + $0x10] sm:$0xff]
        %929 = vmatprep.subr.mxu0 %v431
        %930 = vmatpush1.msra.mxu0 %v430
        %931 = vmatprep.subr.mxu0 %v434
        %932 = vmatpush1.msra.mxu0 %v433
        %933 = vmatprep.subr.mxu0 %v437
        %934 = vmatpush1.msra.mxu0 %v436
        %935 = vmatprep.subr.mxu0 %v440
        %936 = vmatpush1.msra.mxu0 %v439
        %937 = vmatprep.subr.mxu0 %v443
        %938 = vmatpush1.msra.mxu0 %v442
        %939 = vmatprep.subr.mxu0 %v446
        %940 = vmatpush1.msra.mxu0 %v445
        %941 = vmatprep.subr.mxu0 %v449
        %942 = vmatpush1.msra.mxu0 %v448
        %943 = vmatprep.subr.mxu0 %v452
        %944 = vmatpush1.msra.mxu0 %v451
        %945 = vmatprep.subr.mxu0 %v455
        %946 = vmatpush1.msra.mxu0 %v454
        %947 = vmatprep.subr.mxu0 %v458
        %948 = vmatpush1.msra.mxu0 %v457
        %949 = vmatprep.subr.mxu0 %v461
        %950 = vmatpush1.msra.mxu0 %v460
        %951 = vmatprep.subr.mxu0 %v464
        %952 = vmatpush1.msra.mxu0 %v463
        %953 = vmatprep.subr.mxu0 %v467
        %954 = vmatpush1.msra.mxu0 %v466
        %955 = vmatprep.subr.mxu0 %v470
        %956 = vmatpush1.msra.mxu0 %v469
        %957 = vmatprep.subr.mxu0 %v473
        %958 = vmatpush1.msra.mxu0 %v472
        %959 = vmatprep.subr.mxu0 %v476
        %960 = vmatpush1.msra.mxu0 %v475
        %961 = vmatprep.subr.mxu0 0.0
        %962 = vmatpush1.msra.mxu0 0.0
        %963 = vmatprep.subr.mxu0 0.0
        %964 = vmatpush1.msra.mxu0 0.0
        %965 = vmatprep.subr.mxu0 0.0
        %966 = vmatpush1.msra.mxu0 0.0
        %967 = vmatprep.subr.mxu0 0.0
        %968 = vmatpush1.msra.mxu0 0.0
        %969 = vmatprep.subr.mxu0 0.0
        %970 = vmatpush1.msra.mxu0 0.0
        %971 = vmatprep.subr.mxu0 0.0
        %972 = vmatpush1.msra.mxu0 0.0
        %973 = vmatprep.subr.mxu0 0.0
        %974 = vmatpush1.msra.mxu0 0.0
        %975 = vmatprep.subr.mxu0 0.0
        %976 = vmatpush1.msra.mxu0 0.0
        %977 = vmatprep.subr.mxu0 0.0
        %978 = vmatpush1.msra.mxu0 0.0
        %979 = vmatprep.subr.mxu0 0.0
        %980 = vmatpush1.msra.mxu0 0.0
        %981 = vmatprep.subr.mxu0 0.0
        %982 = vmatpush1.msra.mxu0 0.0
        %983 = vmatprep.subr.mxu0 0.0
        %984 = vmatpush1.msra.mxu0 0.0
        %985 = vmatprep.subr.mxu0 0.0
        %986 = vmatpush1.msra.mxu0 0.0
        %987 = vmatprep.subr.mxu0 0.0
        %988 = vmatpush1.msra.mxu0 0.0
        %989 = vmatprep.subr.mxu0 0.0
        %990 = vmatpush1.msra.mxu0 0.0
        %991 = vmatprep.subr.mxu0 0.0
        %992 = vmatpush1.msra.mxu0 0.0
        %993 = vmatprep.mubr.f32.mxu0 0.0
        %994 = vmatmul.mubr.f32.gmra.mrb[0].mxu0 %v900
        %v995 = vpop.f32.mrb[0].mxu0
        %v996 = vadd.f32 0.0, %v995
        %v997 = vpop.f32.mrb[0].mxu0
        %v998 = vadd.f32 0.0, %v997
        %999 = vdwg.mxu0
        %1000 = vmatprep.subr.mxu0 0.0
        %1001 = vmatpush1.msra.mxu0 %v432
        %1002 = vmatprep.subr.mxu0 0.0
        %1003 = vmatpush1.msra.mxu0 %v435
        %1004 = vmatprep.subr.mxu0 0.0
        %1005 = vmatpush1.msra.mxu0 %v438
        %1006 = vmatprep.subr.mxu0 0.0
        %1007 = vmatpush1.msra.mxu0 %v441
        %1008 = vmatprep.subr.mxu0 0.0
        %1009 = vmatpush1.msra.mxu0 %v444
        %1010 = vmatprep.subr.mxu0 0.0
        %1011 = vmatpush1.msra.mxu0 %v447
        %1012 = vmatprep.subr.mxu0 0.0
        %1013 = vmatpush1.msra.mxu0 %v450
        %1014 = vmatprep.subr.mxu0 0.0
        %1015 = vmatpush1.msra.mxu0 %v453
        %1016 = vmatprep.subr.mxu0 0.0
        %1017 = vmatpush1.msra.mxu0 %v456
        %1018 = vmatprep.subr.mxu0 0.0
        %1019 = vmatpush1.msra.mxu0 %v459
        %1020 = vmatprep.subr.mxu0 0.0
        %1021 = vmatpush1.msra.mxu0 %v462
        %1022 = vmatprep.subr.mxu0 0.0
        %1023 = vmatpush1.msra.mxu0 %v465
        %1024 = vmatprep.subr.mxu0 0.0
        %1025 = vmatpush1.msra.mxu0 %v468
        %1026 = vmatprep.subr.mxu0 0.0
        %1027 = vmatpush1.msra.mxu0 %v471
        %1028 = vmatprep.subr.mxu0 0.0
        %1029 = vmatpush1.msra.mxu0 %v474
        %1030 = vmatprep.subr.mxu0 0.0
        %1031 = vmatpush1.msra.mxu0 %v477
        %1032 = vmatprep.subr.mxu0 0.0
        %1033 = vmatpush1.msra.mxu0 0.0
        %1034 = vmatprep.subr.mxu0 0.0
        %1035 = vmatpush1.msra.mxu0 0.0
        %1036 = vmatprep.subr.mxu0 0.0
        %1037 = vmatpush1.msra.mxu0 0.0
        %1038 = vmatprep.subr.mxu0 0.0
        %1039 = vmatpush1.msra.mxu0 0.0
        %1040 = vmatprep.subr.mxu0 0.0
        %1041 = vmatpush1.msra.mxu0 0.0
        %1042 = vmatprep.subr.mxu0 0.0
        %1043 = vmatpush1.msra.mxu0 0.0
        %1044 = vmatprep.subr.mxu0 0.0
        %1045 = vmatpush1.msra.mxu0 0.0
        %1046 = vmatprep.subr.mxu0 0.0
        %1047 = vmatpush1.msra.mxu0 0.0
        %1048 = vmatprep.subr.mxu0 0.0
        %1049 = vmatpush1.msra.mxu0 0.0
        %1050 = vmatprep.subr.mxu0 0.0
        %1051 = vmatpush1.msra.mxu0 0.0
        %1052 = vmatprep.subr.mxu0 0.0
        %1053 = vmatpush1.msra.mxu0 0.0
        %1054 = vmatprep.subr.mxu0 0.0
        %1055 = vmatpush1.msra.mxu0 0.0
        %1056 = vmatprep.subr.mxu0 0.0
        %1057 = vmatpush1.msra.mxu0 0.0
        %1058 = vmatprep.subr.mxu0 0.0
        %1059 = vmatpush1.msra.mxu0 0.0
        %1060 = vmatprep.subr.mxu0 0.0
        %1061 = vmatpush1.msra.mxu0 0.0
        %1062 = vmatprep.subr.mxu0 0.0
        %1063 = vmatpush1.msra.mxu0 0.0
        %1064 = vmatprep.mubr.f32.mxu0 0.0
        %1065 = vmatmul.mubr.f32.gmra.mrb[0].mxu0 %v900
        %v1066 = vpop.f32.mrb[0].mxu0
        %v1067 = vadd.f32 0.0, %v1066
        %v1068 = vpop.f32.mrb[0].mxu0
        %1069 = vdwg.mxu0
        %v1070 = vadd.f32 %v926, %v996
        %v1071 = vxor.u32 %v1070, 2147483648
        %v1072 = vmul.f32 %v1071, 1.442695
        %v1073 = vpow.pop %v1072
        %v1074 = vadd.f32 %v1073, 1.0
        %v1075 = vrcp.pop %v1074
        %v1076 = vmul.f32 1.0, %v1075
        %v1077 = vadd.f32 %v927, %v998
        %v1078 = vxor.u32 %v1077, 2147483648
        %v1079 = vmul.f32 %v1078, 1.442695
        %v1080 = vpow.pop %v1079
        %v1081 = vadd.f32 %v1080, 1.0
        %v1082 = vrcp.pop %v1081
        %v1083 = vmul.f32 1.0, %v1082
        %v1084 = vadd.f32 %v1067, %v704
        %v1085 = vmul.f32 %v1076, %v1084
        %v1086 = vadd.f32 %v928, %v1085
        %v1087 = vtanh.pop %v1086
        %v1088 = vsub.f32 1.0, %v1083
        %v1089 = vmul.f32 %v1088, %v1087
        %v1090 = vmul.f32 %v1083, %v900
        %v1091 = vadd.f32 %v1089, %v1090
        %s1092 = scalar_lea.vmem %s371, 48 [#allocation9]
        %v1093 = vld [vmem:[%s1092] sm:$0xff]
        %v1094 = vld [vmem:[%s1092 + $0x8] sm:$0xff]
        %v1095 = vld [vmem:[%s1092 + $0x10] sm:$0xff]
        %1096 = vmatprep.subr.mxu0 %v479
        %1097 = vmatpush1.msra.mxu0 %v478
        %1098 = vmatprep.subr.mxu0 %v482
        %1099 = vmatpush1.msra.mxu0 %v481
        %1100 = vmatprep.subr.mxu0 %v485
        %1101 = vmatpush1.msra.mxu0 %v484
        %1102 = vmatprep.subr.mxu0 %v488
        %1103 = vmatpush1.msra.mxu0 %v487
        %1104 = vmatprep.subr.mxu0 %v491
        %1105 = vmatpush1.msra.mxu0 %v490
        %1106 = vmatprep.subr.mxu0 %v494
        %1107 = vmatpush1.msra.mxu0 %v493
        %1108 = vmatprep.subr.mxu0 %v497
        %1109 = vmatpush1.msra.mxu0 %v496
        %1110 = vmatprep.subr.mxu0 %v500
        %1111 = vmatpush1.msra.mxu0 %v499
        %1112 = vmatprep.subr.mxu0 %v503
        %1113 = vmatpush1.msra.mxu0 %v502
        %1114 = vmatprep.subr.mxu0 %v506
        %1115 = vmatpush1.msra.mxu0 %v505
        %1116 = vmatprep.subr.mxu0 %v509
        %1117 = vmatpush1.msra.mxu0 %v508
        %1118 = vmatprep.subr.mxu0 %v512
        %1119 = vmatpush1.msra.mxu0 %v511
        %1120 = vmatprep.subr.mxu0 %v515
        %1121 = vmatpush1.msra.mxu0 %v514
        %1122 = vmatprep.subr.mxu0 %v518
        %1123 = vmatpush1.msra.mxu0 %v517
        %1124 = vmatprep.subr.mxu0 %v521
        %1125 = vmatpush1.msra.mxu0 %v520
        %1126 = vmatprep.subr.mxu0 %v524
        %1127 = vmatpush1.msra.mxu0 %v523
        %1128 = vmatprep.subr.mxu0 0.0
        %1129 = vmatpush1.msra.mxu0 0.0
        %1130 = vmatprep.subr.mxu0 0.0
        %1131 = vmatpush1.msra.mxu0 0.0
        %1132 = vmatprep.subr.mxu0 0.0
        %1133 = vmatpush1.msra.mxu0 0.0
        %1134 = vmatprep.subr.mxu0 0.0
        %1135 = vmatpush1.msra.mxu0 0.0
        %1136 = vmatprep.subr.mxu0 0.0
        %1137 = vmatpush1.msra.mxu0 0.0
        %1138 = vmatprep.subr.mxu0 0.0
        %1139 = vmatpush1.msra.mxu0 0.0
        %1140 = vmatprep.subr.mxu0 0.0
        %1141 = vmatpush1.msra.mxu0 0.0
        %1142 = vmatprep.subr.mxu0 0.0
        %1143 = vmatpush1.msra.mxu0 0.0
        %1144 = vmatprep.subr.mxu0 0.0
        %1145 = vmatpush1.msra.mxu0 0.0
        %1146 = vmatprep.subr.mxu0 0.0
        %1147 = vmatpush1.msra.mxu0 0.0
        %1148 = vmatprep.subr.mxu0 0.0
        %1149 = vmatpush1.msra.mxu0 0.0
        %1150 = vmatprep.subr.mxu0 0.0
        %1151 = vmatpush1.msra.mxu0 0.0
        %1152 = vmatprep.subr.mxu0 0.0
        %1153 = vmatpush1.msra.mxu0 0.0
        %1154 = vmatprep.subr.mxu0 0.0
        %1155 = vmatpush1.msra.mxu0 0.0
        %1156 = vmatprep.subr.mxu0 0.0
        %1157 = vmatpush1.msra.mxu0 0.0
        %1158 = vmatprep.subr.mxu0 0.0
        %1159 = vmatpush1.msra.mxu0 0.0
        %1160 = vmatprep.mubr.f32.mxu0 0.0
        %1161 = vmatmul.mubr.f32.gmra.mrb[0].mxu0 %v914
        %v1162 = vpop.f32.mrb[0].mxu0
        %v1163 = vadd.f32 0.0, %v1162
        %v1164 = vpop.f32.mrb[0].mxu0
        %v1165 = vadd.f32 0.0, %v1164
        %1166 = vdwg.mxu0
        %1167 = vmatprep.subr.mxu0 0.0
        %1168 = vmatpush1.msra.mxu0 %v480
        %1169 = vmatprep.subr.mxu0 0.0
        %1170 = vmatpush1.msra.mxu0 %v483
        %1171 = vmatprep.subr.mxu0 0.0
        %1172 = vmatpush1.msra.mxu0 %v486
        %1173 = vmatprep.subr.mxu0 0.0
        %1174 = vmatpush1.msra.mxu0 %v489
        %1175 = vmatprep.subr.mxu0 0.0
        %1176 = vmatpush1.msra.mxu0 %v492
        %1177 = vmatprep.subr.mxu0 0.0
        %1178 = vmatpush1.msra.mxu0 %v495
        %1179 = vmatprep.subr.mxu0 0.0
        %1180 = vmatpush1.msra.mxu0 %v498
        %1181 = vmatprep.subr.mxu0 0.0
        %1182 = vmatpush1.msra.mxu0 %v501
        %1183 = vmatprep.subr.mxu0 0.0
        %1184 = vmatpush1.msra.mxu0 %v504
        %1185 = vmatprep.subr.mxu0 0.0
        %1186 = vmatpush1.msra.mxu0 %v507
        %1187 = vmatprep.subr.mxu0 0.0
        %1188 = vmatpush1.msra.mxu0 %v510
        %1189 = vmatprep.subr.mxu0 0.0
        %1190 = vmatpush1.msra.mxu0 %v513
        %1191 = vmatprep.subr.mxu0 0.0
        %1192 = vmatpush1.msra.mxu0 %v516
        %1193 = vmatprep.subr.mxu0 0.0
        %1194 = vmatpush1.msra.mxu0 %v519
        %1195 = vmatprep.subr.mxu0 0.0
        %1196 = vmatpush1.msra.mxu0 %v522
        %1197 = vmatprep.subr.mxu0 0.0
        %1198 = vmatpush1.msra.mxu0 %v525
        %1199 = vmatprep.subr.mxu0 0.0
        %1200 = vmatpush1.msra.mxu0 0.0
        %1201 = vmatprep.subr.mxu0 0.0
        %1202 = vmatpush1.msra.mxu0 0.0
        %1203 = vmatprep.subr.mxu0 0.0
        %1204 = vmatpush1.msra.mxu0 0.0
        %1205 = vmatprep.subr.mxu0 0.0
        %1206 = vmatpush1.msra.mxu0 0.0
        %1207 = vmatprep.subr.mxu0 0.0
        %1208 = vmatpush1.msra.mxu0 0.0
        %1209 = vmatprep.subr.mxu0 0.0
        %1210 = vmatpush1.msra.mxu0 0.0
        %1211 = vmatprep.subr.mxu0 0.0
        %1212 = vmatpush1.msra.mxu0 0.0
        %1213 = vmatprep.subr.mxu0 0.0
        %1214 = vmatpush1.msra.mxu0 0.0
        %1215 = vmatprep.subr.mxu0 0.0
        %1216 = vmatpush1.msra.mxu0 0.0
        %1217 = vmatprep.subr.mxu0 0.0
        %1218 = vmatpush1.msra.mxu0 0.0
        %1219 = vmatprep.subr.mxu0 0.0
        %1220 = vmatpush1.msra.mxu0 0.0
        %1221 = vmatprep.subr.mxu0 0.0
        %1222 = vmatpush1.msra.mxu0 0.0
        %1223 = vmatprep.subr.mxu0 0.0
        %1224 = vmatpush1.msra.mxu0 0.0
        %1225 = vmatprep.subr.mxu0 0.0
        %1226 = vmatpush1.msra.mxu0 0.0
        %1227 = vmatprep.subr.mxu0 0.0
        %1228 = vmatpush1.msra.mxu0 0.0
        %1229 = vmatprep.subr.mxu0 0.0
        %1230 = vmatpush1.msra.mxu0 0.0
        %1231 = vmatprep.mubr.f32.mxu0 0.0
        %1232 = vmatmul.mubr.f32.gmra.mrb[0].mxu0 %v914
        %v1233 = vpop.f32.mrb[0].mxu0
        %v1234 = vadd.f32 0.0, %v1233
        %v1235 = vpop.f32.mrb[0].mxu0
        %1236 = vdwg.mxu0
        %v1237 = vadd.f32 %v1093, %v1163
        %v1238 = vxor.u32 %v1237, 2147483648
        %v1239 = vmul.f32 %v1238, 1.442695
        %v1240 = vpow.pop %v1239
        %v1241 = vadd.f32 %v1240, 1.0
        %v1242 = vrcp.pop %v1241
        %v1243 = vmul.f32 1.0, %v1242
        %v1244 = vadd.f32 %v1094, %v1165
        %v1245 = vxor.u32 %v1244, 2147483648
        %v1246 = vmul.f32 %v1245, 1.442695
        %v1247 = vpow.pop %v1246
        %v1248 = vadd.f32 %v1247, 1.0
        %v1249 = vrcp.pop %v1248
        %v1250 = vmul.f32 1.0, %v1249
        %v1251 = vadd.f32 %v1234, %v877
        %v1252 = vmul.f32 %v1243, %v1251
        %v1253 = vadd.f32 %v1095, %v1252
        %v1254 = vtanh.pop %v1253
        %v1255 = vsub.f32 1.0, %v1250
        %v1256 = vmul.f32 %v1255, %v1254
        %v1257 = vmul.f32 %v1250, %v914
        %v1258 = vadd.f32 %v1256, %v1257
        %1260 = vset.pattern.permute.xlu0 0
        %1261 = vperm.xlu0 %1260, %v919
        %v1262 = vpop.permute.xlu0 %1261
        %v1264 = vmul.f32 %v1262, %v1091
        %v1265 = vsub.f32 1.0, %v919
        %1267 = vset.pattern.permute.xlu0 0
        %1268 = vperm.xlu0 %1267, %v1265
        %v1269 = vpop.permute.xlu0 %1268
        %v1271 = vmul.f32 %v1269, %v900
        %v1272 = vadd.f32 %v1264, %v1271
        %1274 = vset.pattern.permute.xlu0 0
        %1275 = vperm.xlu0 %1274, %v924
        %v1276 = vpop.permute.xlu0 %1275
        %v1278 = vmul.f32 %v1276, %v1258
        %v1279 = vsub.f32 1.0, %v924
        %1281 = vset.pattern.permute.xlu0 0
        %1282 = vperm.xlu0 %1281, %v1279
        %v1283 = vpop.permute.xlu0 %1282
        %v1285 = vmul.f32 %v1283, %v914
        %v1286 = vadd.f32 %v1278, %v1285
        %s1287 = sadd.s32 %s528, 2
        %v1288 = vstv %s1287
        %vm1289 = vcmp.gt.s32.totalorder %v429, %v1288
        %v1290 = vsel %vm1289, 1, 0
        %v1291 = vcvt.s32.f32 %v1290
        %s1292 = sadd.s32 %s530, 1
        %v1293 = vstv %s1292
        %vm1294 = vcmp.gt.s32.totalorder %v429, %v1293
        %v1295 = vsel %vm1294, 1, 0
        %v1296 = vcvt.s32.f32 %v1295
        %s1297 = scalar_lea.vmem %s362, 48 [#allocation7]
        %v1298 = vld [vmem:[%s1297] sm:$0xff]
        %v1299 = vld [vmem:[%s1297 + $0x8] sm:$0xff]
        %v1300 = vld [vmem:[%s1297 + $0x10] sm:$0xff]
        %1301 = vmatprep.subr.mxu0 %v431
        %1302 = vmatpush1.msra.mxu0 %v430
        %1303 = vmatprep.subr.mxu0 %v434
        %1304 = vmatpush1.msra.mxu0 %v433
        %1305 = vmatprep.subr.mxu0 %v437
        %1306 = vmatpush1.msra.mxu0 %v436
        %1307 = vmatprep.subr.mxu0 %v440
        %1308 = vmatpush1.msra.mxu0 %v439
        %1309 = vmatprep.subr.mxu0 %v443
        %1310 = vmatpush1.msra.mxu0 %v442
        %1311 = vmatprep.subr.mxu0 %v446
        %1312 = vmatpush1.msra.mxu0 %v445
        %1313 = vmatprep.subr.mxu0 %v449
        %1314 = vmatpush1.msra.mxu0 %v448
        %1315 = vmatprep.subr.mxu0 %v452
        %1316 = vmatpush1.msra.mxu0 %v451
        %1317 = vmatprep.subr.mxu0 %v455
        %1318 = vmatpush1.msra.mxu0 %v454
        %1319 = vmatprep.subr.mxu0 %v458
        %1320 = vmatpush1.msra.mxu0 %v457
        %1321 = vmatprep.subr.mxu0 %v461
        %1322 = vmatpush1.msra.mxu0 %v460
        %1323 = vmatprep.subr.mxu0 %v464
        %1324 = vmatpush1.msra.mxu0 %v463
        %1325 = vmatprep.subr.mxu0 %v467
        %1326 = vmatpush1.msra.mxu0 %v466
        %1327 = vmatprep.subr.mxu0 %v470
        %1328 = vmatpush1.msra.mxu0 %v469
        %1329 = vmatprep.subr.mxu0 %v473
        %1330 = vmatpush1.msra.mxu0 %v472
        %1331 = vmatprep.subr.mxu0 %v476
        %1332 = vmatpush1.msra.mxu0 %v475
        %1333 = vmatprep.subr.mxu0 0.0
        %1334 = vmatpush1.msra.mxu0 0.0
        %1335 = vmatprep.subr.mxu0 0.0
        %1336 = vmatpush1.msra.mxu0 0.0
        %1337 = vmatprep.subr.mxu0 0.0
        %1338 = vmatpush1.msra.mxu0 0.0
        %1339 = vmatprep.subr.mxu0 0.0
        %1340 = vmatpush1.msra.mxu0 0.0
        %1341 = vmatprep.subr.mxu0 0.0
        %1342 = vmatpush1.msra.mxu0 0.0
        %1343 = vmatprep.subr.mxu0 0.0
        %1344 = vmatpush1.msra.mxu0 0.0
        %1345 = vmatprep.subr.mxu0 0.0
        %1346 = vmatpush1.msra.mxu0 0.0
        %1347 = vmatprep.subr.mxu0 0.0
        %1348 = vmatpush1.msra.mxu0 0.0
        %1349 = vmatprep.subr.mxu0 0.0
        %1350 = vmatpush1.msra.mxu0 0.0
        %1351 = vmatprep.subr.mxu0 0.0
        %1352 = vmatpush1.msra.mxu0 0.0
        %1353 = vmatprep.subr.mxu0 0.0
        %1354 = vmatpush1.msra.mxu0 0.0
        %1355 = vmatprep.subr.mxu0 0.0
        %1356 = vmatpush1.msra.mxu0 0.0
        %1357 = vmatprep.subr.mxu0 0.0
        %1358 = vmatpush1.msra.mxu0 0.0
        %1359 = vmatprep.subr.mxu0 0.0
        %1360 = vmatpush1.msra.mxu0 0.0
        %1361 = vmatprep.subr.mxu0 0.0
        %1362 = vmatpush1.msra.mxu0 0.0
        %1363 = vmatprep.subr.mxu0 0.0
        %1364 = vmatpush1.msra.mxu0 0.0
        %1365 = vmatprep.mubr.f32.mxu0 0.0
        %1366 = vmatmul.mubr.f32.gmra.mrb[0].mxu0 %v1272
        %v1367 = vpop.f32.mrb[0].mxu0
        %v1368 = vadd.f32 0.0, %v1367
        %v1369 = vpop.f32.mrb[0].mxu0
        %v1370 = vadd.f32 0.0, %v1369
        %1371 = vdwg.mxu0
        %1372 = vmatprep.subr.mxu0 0.0
        %1373 = vmatpush1.msra.mxu0 %v432
        %1374 = vmatprep.subr.mxu0 0.0
        %1375 = vmatpush1.msra.mxu0 %v435
        %1376 = vmatprep.subr.mxu0 0.0
        %1377 = vmatpush1.msra.mxu0 %v438
        %1378 = vmatprep.subr.mxu0 0.0
        %1379 = vmatpush1.msra.mxu0 %v441
        %1380 = vmatprep.subr.mxu0 0.0
        %1381 = vmatpush1.msra.mxu0 %v444
        %1382 = vmatprep.subr.mxu0 0.0
        %1383 = vmatpush1.msra.mxu0 %v447
        %1384 = vmatprep.subr.mxu0 0.0
        %1385 = vmatpush1.msra.mxu0 %v450
        %1386 = vmatprep.subr.mxu0 0.0
        %1387 = vmatpush1.msra.mxu0 %v453
        %1388 = vmatprep.subr.mxu0 0.0
        %1389 = vmatpush1.msra.mxu0 %v456
        %1390 = vmatprep.subr.mxu0 0.0
        %1391 = vmatpush1.msra.mxu0 %v459
        %1392 = vmatprep.subr.mxu0 0.0
        %1393 = vmatpush1.msra.mxu0 %v462
        %1394 = vmatprep.subr.mxu0 0.0
        %1395 = vmatpush1.msra.mxu0 %v465
        %1396 = vmatprep.subr.mxu0 0.0
        %1397 = vmatpush1.msra.mxu0 %v468
        %1398 = vmatprep.subr.mxu0 0.0
        %1399 = vmatpush1.msra.mxu0 %v471
        %1400 = vmatprep.subr.mxu0 0.0
        %1401 = vmatpush1.msra.mxu0 %v474
        %1402 = vmatprep.subr.mxu0 0.0
        %1403 = vmatpush1.msra.mxu0 %v477
        %1404 = vmatprep.subr.mxu0 0.0
        %1405 = vmatpush1.msra.mxu0 0.0
        %1406 = vmatprep.subr.mxu0 0.0
        %1407 = vmatpush1.msra.mxu0 0.0
        %1408 = vmatprep.subr.mxu0 0.0
        %1409 = vmatpush1.msra.mxu0 0.0
        %1410 = vmatprep.subr.mxu0 0.0
        %1411 = vmatpush1.msra.mxu0 0.0
        %1412 = vmatprep.subr.mxu0 0.0
        %1413 = vmatpush1.msra.mxu0 0.0
        %1414 = vmatprep.subr.mxu0 0.0
        %1415 = vmatpush1.msra.mxu0 0.0
        %1416 = vmatprep.subr.mxu0 0.0
        %1417 = vmatpush1.msra.mxu0 0.0
        %1418 = vmatprep.subr.mxu0 0.0
        %1419 = vmatpush1.msra.mxu0 0.0
        %1420 = vmatprep.subr.mxu0 0.0
        %1421 = vmatpush1.msra.mxu0 0.0
        %1422 = vmatprep.subr.mxu0 0.0
        %1423 = vmatpush1.msra.mxu0 0.0
        %1424 = vmatprep.subr.mxu0 0.0
        %1425 = vmatpush1.msra.mxu0 0.0
        %1426 = vmatprep.subr.mxu0 0.0
        %1427 = vmatpush1.msra.mxu0 0.0
        %1428 = vmatprep.subr.mxu0 0.0
        %1429 = vmatpush1.msra.mxu0 0.0
        %1430 = vmatprep.subr.mxu0 0.0
        %1431 = vmatpush1.msra.mxu0 0.0
        %1432 = vmatprep.subr.mxu0 0.0
        %1433 = vmatpush1.msra.mxu0 0.0
        %1434 = vmatprep.subr.mxu0 0.0
        %1435 = vmatpush1.msra.mxu0 0.0
        %1436 = vmatprep.mubr.f32.mxu0 0.0
        %1437 = vmatmul.mubr.f32.gmra.mrb[0].mxu0 %v1272
        %v1438 = vpop.f32.mrb[0].mxu0
        %v1439 = vadd.f32 0.0, %v1438
        %v1440 = vpop.f32.mrb[0].mxu0
        %1441 = vdwg.mxu0
        %v1442 = vadd.f32 %v1298, %v1368
        %v1443 = vxor.u32 %v1442, 2147483648
        %v1444 = vmul.f32 %v1443, 1.442695
        %v1445 = vpow.pop %v1444
        %v1446 = vadd.f32 %v1445, 1.0
        %v1447 = vrcp.pop %v1446
        %v1448 = vmul.f32 1.0, %v1447
        %v1449 = vadd.f32 %v1299, %v1370
        %v1450 = vxor.u32 %v1449, 2147483648
        %v1451 = vmul.f32 %v1450, 1.442695
        %v1452 = vpow.pop %v1451
        %v1453 = vadd.f32 %v1452, 1.0
        %v1454 = vrcp.pop %v1453
        %v1455 = vmul.f32 1.0, %v1454
        %v1456 = vadd.f32 %v1439, %v704
        %v1457 = vmul.f32 %v1448, %v1456
        %v1458 = vadd.f32 %v1300, %v1457
        %v1459 = vtanh.pop %v1458
        %v1460 = vsub.f32 1.0, %v1455
        %v1461 = vmul.f32 %v1460, %v1459
        %v1462 = vmul.f32 %v1455, %v1272
        %v1463 = vadd.f32 %v1461, %v1462
        %s1464 = scalar_lea.vmem %s371, 24 [#allocation9]
        %v1465 = vld [vmem:[%s1464] sm:$0xff]
        %v1466 = vld [vmem:[%s1464 + $0x8] sm:$0xff]
        %v1467 = vld [vmem:[%s1464 + $0x10] sm:$0xff]
        %1468 = vmatprep.subr.mxu0 %v479
        %1469 = vmatpush1.msra.mxu0 %v478
        %1470 = vmatprep.subr.mxu0 %v482
        %1471 = vmatpush1.msra.mxu0 %v481
        %1472 = vmatprep.subr.mxu0 %v485
        %1473 = vmatpush1.msra.mxu0 %v484
        %1474 = vmatprep.subr.mxu0 %v488
        %1475 = vmatpush1.msra.mxu0 %v487
        %1476 = vmatprep.subr.mxu0 %v491
        %1477 = vmatpush1.msra.mxu0 %v490
        %1478 = vmatprep.subr.mxu0 %v494
        %1479 = vmatpush1.msra.mxu0 %v493
        %1480 = vmatprep.subr.mxu0 %v497
        %1481 = vmatpush1.msra.mxu0 %v496
        %1482 = vmatprep.subr.mxu0 %v500
        %1483 = vmatpush1.msra.mxu0 %v499
        %1484 = vmatprep.subr.mxu0 %v503
        %1485 = vmatpush1.msra.mxu0 %v502
        %1486 = vmatprep.subr.mxu0 %v506
        %1487 = vmatpush1.msra.mxu0 %v505
        %1488 = vmatprep.subr.mxu0 %v509
        %1489 = vmatpush1.msra.mxu0 %v508
        %1490 = vmatprep.subr.mxu0 %v512
        %1491 = vmatpush1.msra.mxu0 %v511
        %1492 = vmatprep.subr.mxu0 %v515
        %1493 = vmatpush1.msra.mxu0 %v514
        %1494 = vmatprep.subr.mxu0 %v518
        %1495 = vmatpush1.msra.mxu0 %v517
        %1496 = vmatprep.subr.mxu0 %v521
        %1497 = vmatpush1.msra.mxu0 %v520
        %1498 = vmatprep.subr.mxu0 %v524
        %1499 = vmatpush1.msra.mxu0 %v523
        %1500 = vmatprep.subr.mxu0 0.0
        %1501 = vmatpush1.msra.mxu0 0.0
        %1502 = vmatprep.subr.mxu0 0.0
        %1503 = vmatpush1.msra.mxu0 0.0
        %1504 = vmatprep.subr.mxu0 0.0
        %1505 = vmatpush1.msra.mxu0 0.0
        %1506 = vmatprep.subr.mxu0 0.0
        %1507 = vmatpush1.msra.mxu0 0.0
        %1508 = vmatprep.subr.mxu0 0.0
        %1509 = vmatpush1.msra.mxu0 0.0
        %1510 = vmatprep.subr.mxu0 0.0
        %1511 = vmatpush1.msra.mxu0 0.0
        %1512 = vmatprep.subr.mxu0 0.0
        %1513 = vmatpush1.msra.mxu0 0.0
        %1514 = vmatprep.subr.mxu0 0.0
        %1515 = vmatpush1.msra.mxu0 0.0
        %1516 = vmatprep.subr.mxu0 0.0
        %1517 = vmatpush1.msra.mxu0 0.0
        %1518 = vmatprep.subr.mxu0 0.0
        %1519 = vmatpush1.msra.mxu0 0.0
        %1520 = vmatprep.subr.mxu0 0.0
        %1521 = vmatpush1.msra.mxu0 0.0
        %1522 = vmatprep.subr.mxu0 0.0
        %1523 = vmatpush1.msra.mxu0 0.0
        %1524 = vmatprep.subr.mxu0 0.0
        %1525 = vmatpush1.msra.mxu0 0.0
        %1526 = vmatprep.subr.mxu0 0.0
        %1527 = vmatpush1.msra.mxu0 0.0
        %1528 = vmatprep.subr.mxu0 0.0
        %1529 = vmatpush1.msra.mxu0 0.0
        %1530 = vmatprep.subr.mxu0 0.0
        %1531 = vmatpush1.msra.mxu0 0.0
        %1532 = vmatprep.mubr.f32.mxu0 0.0
        %1533 = vmatmul.mubr.f32.gmra.mrb[0].mxu0 %v1286
        %v1534 = vpop.f32.mrb[0].mxu0
        %v1535 = vadd.f32 0.0, %v1534
        %v1536 = vpop.f32.mrb[0].mxu0
        %v1537 = vadd.f32 0.0, %v1536
        %1538 = vdwg.mxu0
        %1539 = vmatprep.subr.mxu0 0.0
        %1540 = vmatpush1.msra.mxu0 %v480
        %1541 = vmatprep.subr.mxu0 0.0
        %1542 = vmatpush1.msra.mxu0 %v483
        %1543 = vmatprep.subr.mxu0 0.0
        %1544 = vmatpush1.msra.mxu0 %v486
        %1545 = vmatprep.subr.mxu0 0.0
        %1546 = vmatpush1.msra.mxu0 %v489
        %1547 = vmatprep.subr.mxu0 0.0
        %1548 = vmatpush1.msra.mxu0 %v492
        %1549 = vmatprep.subr.mxu0 0.0
        %1550 = vmatpush1.msra.mxu0 %v495
        %1551 = vmatprep.subr.mxu0 0.0
        %1552 = vmatpush1.msra.mxu0 %v498
        %1553 = vmatprep.subr.mxu0 0.0
        %1554 = vmatpush1.msra.mxu0 %v501
        %1555 = vmatprep.subr.mxu0 0.0
        %1556 = vmatpush1.msra.mxu0 %v504
        %1557 = vmatprep.subr.mxu0 0.0
        %1558 = vmatpush1.msra.mxu0 %v507
        %1559 = vmatprep.subr.mxu0 0.0
        %1560 = vmatpush1.msra.mxu0 %v510
        %1561 = vmatprep.subr.mxu0 0.0
        %1562 = vmatpush1.msra.mxu0 %v513
        %1563 = vmatprep.subr.mxu0 0.0
        %1564 = vmatpush1.msra.mxu0 %v516
        %1565 = vmatprep.subr.mxu0 0.0
        %1566 = vmatpush1.msra.mxu0 %v519
        %1567 = vmatprep.subr.mxu0 0.0
        %1568 = vmatpush1.msra.mxu0 %v522
        %1569 = vmatprep.subr.mxu0 0.0
        %1570 = vmatpush1.msra.mxu0 %v525
        %1571 = vmatprep.subr.mxu0 0.0
        %1572 = vmatpush1.msra.mxu0 0.0
        %1573 = vmatprep.subr.mxu0 0.0
        %1574 = vmatpush1.msra.mxu0 0.0
        %1575 = vmatprep.subr.mxu0 0.0
        %1576 = vmatpush1.msra.mxu0 0.0
        %1577 = vmatprep.subr.mxu0 0.0
        %1578 = vmatpush1.msra.mxu0 0.0
        %1579 = vmatprep.subr.mxu0 0.0
        %1580 = vmatpush1.msra.mxu0 0.0
        %1581 = vmatprep.subr.mxu0 0.0
        %1582 = vmatpush1.msra.mxu0 0.0
        %1583 = vmatprep.subr.mxu0 0.0
        %1584 = vmatpush1.msra.mxu0 0.0
        %1585 = vmatprep.subr.mxu0 0.0
        %1586 = vmatpush1.msra.mxu0 0.0
        %1587 = vmatprep.subr.mxu0 0.0
        %1588 = vmatpush1.msra.mxu0 0.0
        %1589 = vmatprep.subr.mxu0 0.0
        %1590 = vmatpush1.msra.mxu0 0.0
        %1591 = vmatprep.subr.mxu0 0.0
        %1592 = vmatpush1.msra.mxu0 0.0
        %1593 = vmatprep.subr.mxu0 0.0
        %1594 = vmatpush1.msra.mxu0 0.0
        %1595 = vmatprep.subr.mxu0 0.0
        %1596 = vmatpush1.msra.mxu0 0.0
        %1597 = vmatprep.subr.mxu0 0.0
        %1598 = vmatpush1.msra.mxu0 0.0
        %1599 = vmatprep.subr.mxu0 0.0
        %1600 = vmatpush1.msra.mxu0 0.0
        %1601 = vmatprep.subr.mxu0 0.0
        %1602 = vmatpush1.msra.mxu0 0.0
        %1603 = vmatprep.mubr.f32.mxu0 0.0
        %1604 = vmatmul.mubr.f32.gmra.mrb[0].mxu0 %v1286
        %v1605 = vpop.f32.mrb[0].mxu0
        %v1606 = vadd.f32 0.0, %v1605
        %v1607 = vpop.f32.mrb[0].mxu0
        %1608 = vdwg.mxu0
        %v1609 = vadd.f32 %v1465, %v1535
        %v1610 = vxor.u32 %v1609, 2147483648
        %v1611 = vmul.f32 %v1610, 1.442695
        %v1612 = vpow.pop %v1611
        %v1613 = vadd.f32 %v1612, 1.0
        %v1614 = vrcp.pop %v1613
        %v1615 = vmul.f32 1.0, %v1614
        %v1616 = vadd.f32 %v1466, %v1537
        %v1617 = vxor.u32 %v1616, 2147483648
        %v1618 = vmul.f32 %v1617, 1.442695
        %v1619 = vpow.pop %v1618
        %v1620 = vadd.f32 %v1619, 1.0
        %v1621 = vrcp.pop %v1620
        %v1622 = vmul.f32 1.0, %v1621
        %v1623 = vadd.f32 %v1606, %v877
        %v1624 = vmul.f32 %v1615, %v1623
        %v1625 = vadd.f32 %v1467, %v1624
        %v1626 = vtanh.pop %v1625
        %v1627 = vsub.f32 1.0, %v1622
        %v1628 = vmul.f32 %v1627, %v1626
        %v1629 = vmul.f32 %v1622, %v1286
        %v1630 = vadd.f32 %v1628, %v1629
        %1632 = vset.pattern.permute.xlu0 0
        %1633 = vperm.xlu0 %1632, %v1291
        %v1634 = vpop.permute.xlu0 %1633
        %v1636 = vmul.f32 %v1634, %v1463
        %v1637 = vsub.f32 1.0, %v1291
        %1639 = vset.pattern.permute.xlu0 0
        %1640 = vperm.xlu0 %1639, %v1637
        %v1641 = vpop.permute.xlu0 %1640
        %v1643 = vmul.f32 %v1641, %v1272
        %v1644 = vadd.f32 %v1636, %v1643
        %1646 = vset.pattern.permute.xlu0 0
        %1647 = vperm.xlu0 %1646, %v1296
        %v1648 = vpop.permute.xlu0 %1647
        %v1650 = vmul.f32 %v1648, %v1630
        %v1651 = vsub.f32 1.0, %v1296
        %1653 = vset.pattern.permute.xlu0 0
        %1654 = vperm.xlu0 %1653, %v1651
        %v1655 = vpop.permute.xlu0 %1654
        %v1657 = vmul.f32 %v1655, %v1286
        %v1658 = vadd.f32 %v1650, %v1657
        %s1659 = sadd.s32 %s528, 3
        %v1660 = vstv %s1659
        %vm1661 = vcmp.gt.s32.totalorder %v429, %v1660
        %v1662 = vsel %vm1661, 1, 0
        %v1663 = vcvt.s32.f32 %v1662
        %v1664 = vstv %s530
        %vm1665 = vcmp.gt.s32.totalorder %v429, %v1664
        %v1666 = vsel %vm1665, 1, 0
        %v1667 = vcvt.s32.f32 %v1666
        %s1668 = scalar_lea.vmem %s362, 72 [#allocation7]
        %v1669 = vld [vmem:[%s1668] sm:$0xff]
        %v1670 = vld [vmem:[%s1668 + $0x8] sm:$0xff]
        %v1671 = vld [vmem:[%s1668 + $0x10] sm:$0xff]
        %1672 = vmatprep.subr.mxu0 %v431
        %1673 = vmatpush1.msra.mxu0 %v430
        %1674 = vmatprep.subr.mxu0 %v434
        %1675 = vmatpush1.msra.mxu0 %v433
        %1676 = vmatprep.subr.mxu0 %v437
        %1677 = vmatpush1.msra.mxu0 %v436
        %1678 = vmatprep.subr.mxu0 %v440
        %1679 = vmatpush1.msra.mxu0 %v439
        %1680 = vmatprep.subr.mxu0 %v443
        %1681 = vmatpush1.msra.mxu0 %v442
        %1682 = vmatprep.subr.mxu0 %v446
        %1683 = vmatpush1.msra.mxu0 %v445
        %1684 = vmatprep.subr.mxu0 %v449
        %1685 = vmatpush1.msra.mxu0 %v448
        %1686 = vmatprep.subr.mxu0 %v452
        %1687 = vmatpush1.msra.mxu0 %v451
        %1688 = vmatprep.subr.mxu0 %v455
        %1689 = vmatpush1.msra.mxu0 %v454
        %1690 = vmatprep.subr.mxu0 %v458
        %1691 = vmatpush1.msra.mxu0 %v457
        %1692 = vmatprep.subr.mxu0 %v461
        %1693 = vmatpush1.msra.mxu0 %v460
        %1694 = vmatprep.subr.mxu0 %v464
        %1695 = vmatpush1.msra.mxu0 %v463
        %1696 = vmatprep.subr.mxu0 %v467
        %1697 = vmatpush1.msra.mxu0 %v466
        %1698 = vmatprep.subr.mxu0 %v470
        %1699 = vmatpush1.msra.mxu0 %v469
        %1700 = vmatprep.subr.mxu0 %v473
        %1701 = vmatpush1.msra.mxu0 %v472
        %1702 = vmatprep.subr.mxu0 %v476
        %1703 = vmatpush1.msra.mxu0 %v475
        %1704 = vmatprep.subr.mxu0 0.0
        %1705 = vmatpush1.msra.mxu0 0.0
        %1706 = vmatprep.subr.mxu0 0.0
        %1707 = vmatpush1.msra.mxu0 0.0
        %1708 = vmatprep.subr.mxu0 0.0
        %1709 = vmatpush1.msra.mxu0 0.0
        %1710 = vmatprep.subr.mxu0 0.0
        %1711 = vmatpush1.msra.mxu0 0.0
        %1712 = vmatprep.subr.mxu0 0.0
        %1713 = vmatpush1.msra.mxu0 0.0
        %1714 = vmatprep.subr.mxu0 0.0
        %1715 = vmatpush1.msra.mxu0 0.0
        %1716 = vmatprep.subr.mxu0 0.0
        %1717 = vmatpush1.msra.mxu0 0.0
        %1718 = vmatprep.subr.mxu0 0.0
        %1719 = vmatpush1.msra.mxu0 0.0
        %1720 = vmatprep.subr.mxu0 0.0
        %1721 = vmatpush1.msra.mxu0 0.0
        %1722 = vmatprep.subr.mxu0 0.0
        %1723 = vmatpush1.msra.mxu0 0.0
        %1724 = vmatprep.subr.mxu0 0.0
        %1725 = vmatpush1.msra.mxu0 0.0
        %1726 = vmatprep.subr.mxu0 0.0
        %1727 = vmatpush1.msra.mxu0 0.0
        %1728 = vmatprep.subr.mxu0 0.0
        %1729 = vmatpush1.msra.mxu0 0.0
        %1730 = vmatprep.subr.mxu0 0.0
        %1731 = vmatpush1.msra.mxu0 0.0
        %1732 = vmatprep.subr.mxu0 0.0
        %1733 = vmatpush1.msra.mxu0 0.0
        %1734 = vmatprep.subr.mxu0 0.0
        %1735 = vmatpush1.msra.mxu0 0.0
        %1736 = vmatprep.mubr.f32.mxu0 0.0
        %1737 = vmatmul.mubr.f32.gmra.mrb[0].mxu0 %v1644
        %v1738 = vpop.f32.mrb[0].mxu0
        %v1739 = vadd.f32 0.0, %v1738
        %v1740 = vpop.f32.mrb[0].mxu0
        %v1741 = vadd.f32 0.0, %v1740
        %1742 = vdwg.mxu0
        %1743 = vmatprep.subr.mxu0 0.0
        %1744 = vmatpush1.msra.mxu0 %v432
        %1745 = vmatprep.subr.mxu0 0.0
        %1746 = vmatpush1.msra.mxu0 %v435
        %1747 = vmatprep.subr.mxu0 0.0
        %1748 = vmatpush1.msra.mxu0 %v438
        %1749 = vmatprep.subr.mxu0 0.0
        %1750 = vmatpush1.msra.mxu0 %v441
        %1751 = vmatprep.subr.mxu0 0.0
        %1752 = vmatpush1.msra.mxu0 %v444
        %1753 = vmatprep.subr.mxu0 0.0
        %1754 = vmatpush1.msra.mxu0 %v447
        %1755 = vmatprep.subr.mxu0 0.0
        %1756 = vmatpush1.msra.mxu0 %v450
        %1757 = vmatprep.subr.mxu0 0.0
        %1758 = vmatpush1.msra.mxu0 %v453
        %1759 = vmatprep.subr.mxu0 0.0
        %1760 = vmatpush1.msra.mxu0 %v456
        %1761 = vmatprep.subr.mxu0 0.0
        %1762 = vmatpush1.msra.mxu0 %v459
        %1763 = vmatprep.subr.mxu0 0.0
        %1764 = vmatpush1.msra.mxu0 %v462
        %1765 = vmatprep.subr.mxu0 0.0
        %1766 = vmatpush1.msra.mxu0 %v465
        %1767 = vmatprep.subr.mxu0 0.0
        %1768 = vmatpush1.msra.mxu0 %v468
        %1769 = vmatprep.subr.mxu0 0.0
        %1770 = vmatpush1.msra.mxu0 %v471
        %1771 = vmatprep.subr.mxu0 0.0
        %1772 = vmatpush1.msra.mxu0 %v474
        %1773 = vmatprep.subr.mxu0 0.0
        %1774 = vmatpush1.msra.mxu0 %v477
        %1775 = vmatprep.subr.mxu0 0.0
        %1776 = vmatpush1.msra.mxu0 0.0
        %1777 = vmatprep.subr.mxu0 0.0
        %1778 = vmatpush1.msra.mxu0 0.0
        %1779 = vmatprep.subr.mxu0 0.0
        %1780 = vmatpush1.msra.mxu0 0.0
        %1781 = vmatprep.subr.mxu0 0.0
        %1782 = vmatpush1.msra.mxu0 0.0
        %1783 = vmatprep.subr.mxu0 0.0
        %1784 = vmatpush1.msra.mxu0 0.0
        %1785 = vmatprep.subr.mxu0 0.0
        %1786 = vmatpush1.msra.mxu0 0.0
        %1787 = vmatprep.subr.mxu0 0.0
        %1788 = vmatpush1.msra.mxu0 0.0
        %1789 = vmatprep.subr.mxu0 0.0
        %1790 = vmatpush1.msra.mxu0 0.0
        %1791 = vmatprep.subr.mxu0 0.0
        %1792 = vmatpush1.msra.mxu0 0.0
        %1793 = vmatprep.subr.mxu0 0.0
        %1794 = vmatpush1.msra.mxu0 0.0
        %1795 = vmatprep.subr.mxu0 0.0
        %1796 = vmatpush1.msra.mxu0 0.0
        %1797 = vmatprep.subr.mxu0 0.0
        %1798 = vmatpush1.msra.mxu0 0.0
        %1799 = vmatprep.subr.mxu0 0.0
        %1800 = vmatpush1.msra.mxu0 0.0
        %1801 = vmatprep.subr.mxu0 0.0
        %1802 = vmatpush1.msra.mxu0 0.0
        %1803 = vmatprep.subr.mxu0 0.0
        %1804 = vmatpush1.msra.mxu0 0.0
        %1805 = vmatprep.subr.mxu0 0.0
        %1806 = vmatpush1.msra.mxu0 0.0
        %1807 = vmatprep.mubr.f32.mxu0 0.0
        %1808 = vmatmul.mubr.f32.gmra.mrb[0].mxu0 %v1644
        %v1809 = vpop.f32.mrb[0].mxu0
        %v1810 = vadd.f32 0.0, %v1809
        %v1811 = vpop.f32.mrb[0].mxu0
        %1812 = vdwg.mxu0
        %v1813 = vadd.f32 %v1669, %v1739
        %v1814 = vxor.u32 %v1813, 2147483648
        %v1815 = vmul.f32 %v1814, 1.442695
        %v1816 = vpow.pop %v1815
        %v1817 = vadd.f32 %v1816, 1.0
        %v1818 = vrcp.pop %v1817
        %v1819 = vmul.f32 1.0, %v1818
        %v1820 = vadd.f32 %v1670, %v1741
        %v1821 = vxor.u32 %v1820, 2147483648
        %v1822 = vmul.f32 %v1821, 1.442695
        %v1823 = vpow.pop %v1822
        %v1824 = vadd.f32 %v1823, 1.0
        %v1825 = vrcp.pop %v1824
        %v1826 = vmul.f32 1.0, %v1825
        %v1827 = vadd.f32 %v1810, %v704
        %v1828 = vmul.f32 %v1819, %v1827
        %v1829 = vadd.f32 %v1671, %v1828
        %v1830 = vtanh.pop %v1829
        %v1831 = vsub.f32 1.0, %v1826
        %v1832 = vmul.f32 %v1831, %v1830
        %v1833 = vmul.f32 %v1826, %v1644
        %v1834 = vadd.f32 %v1832, %v1833
        %v1835 = vld [vmem:[%s371] sm:$0xff]
        %v1836 = vld [vmem:[%s371 + $0x8] sm:$0xff]
        %v1837 = vld [vmem:[%s371 + $0x10] sm:$0xff]
        %1838 = vmatprep.subr.mxu0 %v479
        %1839 = vmatpush1.msra.mxu0 %v478
        %1840 = vmatprep.subr.mxu0 %v482
        %1841 = vmatpush1.msra.mxu0 %v481
        %1842 = vmatprep.subr.mxu0 %v485
        %1843 = vmatpush1.msra.mxu0 %v484
        %1844 = vmatprep.subr.mxu0 %v488
        %1845 = vmatpush1.msra.mxu0 %v487
        %1846 = vmatprep.subr.mxu0 %v491
        %1847 = vmatpush1.msra.mxu0 %v490
        %1848 = vmatprep.subr.mxu0 %v494
        %1849 = vmatpush1.msra.mxu0 %v493
        %1850 = vmatprep.subr.mxu0 %v497
        %1851 = vmatpush1.msra.mxu0 %v496
        %1852 = vmatprep.subr.mxu0 %v500
        %1853 = vmatpush1.msra.mxu0 %v499
        %1854 = vmatprep.subr.mxu0 %v503
        %1855 = vmatpush1.msra.mxu0 %v502
        %1856 = vmatprep.subr.mxu0 %v506
        %1857 = vmatpush1.msra.mxu0 %v505
        %1858 = vmatprep.subr.mxu0 %v509
        %1859 = vmatpush1.msra.mxu0 %v508
        %1860 = vmatprep.subr.mxu0 %v512
        %1861 = vmatpush1.msra.mxu0 %v511
        %1862 = vmatprep.subr.mxu0 %v515
        %1863 = vmatpush1.msra.mxu0 %v514
        %1864 = vmatprep.subr.mxu0 %v518
        %1865 = vmatpush1.msra.mxu0 %v517
        %1866 = vmatprep.subr.mxu0 %v521
        %1867 = vmatpush1.msra.mxu0 %v520
        %1868 = vmatprep.subr.mxu0 %v524
        %1869 = vmatpush1.msra.mxu0 %v523
        %1870 = vmatprep.subr.mxu0 0.0
        %1871 = vmatpush1.msra.mxu0 0.0
        %1872 = vmatprep.subr.mxu0 0.0
        %1873 = vmatpush1.msra.mxu0 0.0
        %1874 = vmatprep.subr.mxu0 0.0
        %1875 = vmatpush1.msra.mxu0 0.0
        %1876 = vmatprep.subr.mxu0 0.0
        %1877 = vmatpush1.msra.mxu0 0.0
        %1878 = vmatprep.subr.mxu0 0.0
        %1879 = vmatpush1.msra.mxu0 0.0
        %1880 = vmatprep.subr.mxu0 0.0
        %1881 = vmatpush1.msra.mxu0 0.0
        %1882 = vmatprep.subr.mxu0 0.0
        %1883 = vmatpush1.msra.mxu0 0.0
        %1884 = vmatprep.subr.mxu0 0.0
        %1885 = vmatpush1.msra.mxu0 0.0
        %1886 = vmatprep.subr.mxu0 0.0
        %1887 = vmatpush1.msra.mxu0 0.0
        %1888 = vmatprep.subr.mxu0 0.0
        %1889 = vmatpush1.msra.mxu0 0.0
        %1890 = vmatprep.subr.mxu0 0.0
        %1891 = vmatpush1.msra.mxu0 0.0
        %1892 = vmatprep.subr.mxu0 0.0
        %1893 = vmatpush1.msra.mxu0 0.0
        %1894 = vmatprep.subr.mxu0 0.0
        %1895 = vmatpush1.msra.mxu0 0.0
        %1896 = vmatprep.subr.mxu0 0.0
        %1897 = vmatpush1.msra.mxu0 0.0
        %1898 = vmatprep.subr.mxu0 0.0
        %1899 = vmatpush1.msra.mxu0 0.0
        %1900 = vmatprep.subr.mxu0 0.0
        %1901 = vmatpush1.msra.mxu0 0.0
        %1902 = vmatprep.mubr.f32.mxu0 0.0
        %1903 = vmatmul.mubr.f32.gmra.mrb[0].mxu0 %v1658
        %v1904 = vpop.f32.mrb[0].mxu0
        %v1905 = vadd.f32 0.0, %v1904
        %v1906 = vpop.f32.mrb[0].mxu0
        %v1907 = vadd.f32 0.0, %v1906
        %1908 = vdwg.mxu0
        %1909 = vmatprep.subr.mxu0 0.0
        %1910 = vmatpush1.msra.mxu0 %v480
        %1911 = vmatprep.subr.mxu0 0.0
        %1912 = vmatpush1.msra.mxu0 %v483
        %1913 = vmatprep.subr.mxu0 0.0
        %1914 = vmatpush1.msra.mxu0 %v486
        %1915 = vmatprep.subr.mxu0 0.0
        %1916 = vmatpush1.msra.mxu0 %v489
        %1917 = vmatprep.subr.mxu0 0.0
        %1918 = vmatpush1.msra.mxu0 %v492
        %1919 = vmatprep.subr.mxu0 0.0
        %1920 = vmatpush1.msra.mxu0 %v495
        %1921 = vmatprep.subr.mxu0 0.0
        %1922 = vmatpush1.msra.mxu0 %v498
        %1923 = vmatprep.subr.mxu0 0.0
        %1924 = vmatpush1.msra.mxu0 %v501
        %1925 = vmatprep.subr.mxu0 0.0
        %1926 = vmatpush1.msra.mxu0 %v504
        %1927 = vmatprep.subr.mxu0 0.0
        %1928 = vmatpush1.msra.mxu0 %v507
        %1929 = vmatprep.subr.mxu0 0.0
        %1930 = vmatpush1.msra.mxu0 %v510
        %1931 = vmatprep.subr.mxu0 0.0
        %1932 = vmatpush1.msra.mxu0 %v513
        %1933 = vmatprep.subr.mxu0 0.0
        %1934 = vmatpush1.msra.mxu0 %v516
        %1935 = vmatprep.subr.mxu0 0.0
        %1936 = vmatpush1.msra.mxu0 %v519
        %1937 = vmatprep.subr.mxu0 0.0
        %1938 = vmatpush1.msra.mxu0 %v522
        %1939 = vmatprep.subr.mxu0 0.0
        %1940 = vmatpush1.msra.mxu0 %v525
        %1941 = vmatprep.subr.mxu0 0.0
        %1942 = vmatpush1.msra.mxu0 0.0
        %1943 = vmatprep.subr.mxu0 0.0
        %1944 = vmatpush1.msra.mxu0 0.0
        %1945 = vmatprep.subr.mxu0 0.0
        %1946 = vmatpush1.msra.mxu0 0.0
        %1947 = vmatprep.subr.mxu0 0.0
        %1948 = vmatpush1.msra.mxu0 0.0
        %1949 = vmatprep.subr.mxu0 0.0
        %1950 = vmatpush1.msra.mxu0 0.0
        %1951 = vmatprep.subr.mxu0 0.0
        %1952 = vmatpush1.msra.mxu0 0.0
        %1953 = vmatprep.subr.mxu0 0.0
        %1954 = vmatpush1.msra.mxu0 0.0
        %1955 = vmatprep.subr.mxu0 0.0
        %1956 = vmatpush1.msra.mxu0 0.0
        %1957 = vmatprep.subr.mxu0 0.0
        %1958 = vmatpush1.msra.mxu0 0.0
        %1959 = vmatprep.subr.mxu0 0.0
        %1960 = vmatpush1.msra.mxu0 0.0
        %1961 = vmatprep.subr.mxu0 0.0
        %1962 = vmatpush1.msra.mxu0 0.0
        %1963 = vmatprep.subr.mxu0 0.0
        %1964 = vmatpush1.msra.mxu0 0.0
        %1965 = vmatprep.subr.mxu0 0.0
        %1966 = vmatpush1.msra.mxu0 0.0
        %1967 = vmatprep.subr.mxu0 0.0
        %1968 = vmatpush1.msra.mxu0 0.0
        %1969 = vmatprep.subr.mxu0 0.0
        %1970 = vmatpush1.msra.mxu0 0.0
        %1971 = vmatprep.subr.mxu0 0.0
        %1972 = vmatpush1.msra.mxu0 0.0
        %1973 = vmatprep.mubr.f32.mxu0 0.0
        %1974 = vmatmul.mubr.f32.gmra.mrb[0].mxu0 %v1658
        %v1975 = vpop.f32.mrb[0].mxu0
        %v1976 = vadd.f32 0.0, %v1975
        %v1977 = vpop.f32.mrb[0].mxu0
        %1978 = vdwg.mxu0
        %v1979 = vadd.f32 %v1835, %v1905
        %v1980 = vxor.u32 %v1979, 2147483648
        %v1981 = vmul.f32 %v1980, 1.442695
        %v1982 = vpow.pop %v1981
        %v1983 = vadd.f32 %v1982, 1.0
        %v1984 = vrcp.pop %v1983
        %v1985 = vmul.f32 1.0, %v1984
        %v1986 = vadd.f32 %v1836, %v1907
        %v1987 = vxor.u32 %v1986, 2147483648
        %v1988 = vmul.f32 %v1987, 1.442695
        %v1989 = vpow.pop %v1988
        %v1990 = vadd.f32 %v1989, 1.0
        %v1991 = vrcp.pop %v1990
        %v1992 = vmul.f32 1.0, %v1991
        %v1993 = vadd.f32 %v1976, %v877
        %v1994 = vmul.f32 %v1985, %v1993
        %v1995 = vadd.f32 %v1837, %v1994
        %v1996 = vtanh.pop %v1995
        %v1997 = vsub.f32 1.0, %v1992
        %v1998 = vmul.f32 %v1997, %v1996
        %v1999 = vmul.f32 %v1992, %v1658
        %v2000 = vadd.f32 %v1998, %v1999
        %2002 = vset.pattern.permute.xlu0 0
        %2003 = vperm.xlu0 %2002, %v1663
        %v2004 = vpop.permute.xlu0 %2003
        %v2006 = vmul.f32 %v2004, %v1834
        %v2007 = vsub.f32 1.0, %v1663
        %2009 = vset.pattern.permute.xlu0 0
        %2010 = vperm.xlu0 %2009, %v2007
        %v2011 = vpop.permute.xlu0 %2010
        %v2013 = vmul.f32 %v2011, %v1644
        %v2014 = vadd.f32 %v2006, %v2013
        %2016 = vset.pattern.permute.xlu0 0
        %2017 = vperm.xlu0 %2016, %v1667
        %v2018 = vpop.permute.xlu0 %2017
        %v2020 = vmul.f32 %v2018, %v2000
        %v2021 = vsub.f32 1.0, %v1667
        %2023 = vset.pattern.permute.xlu0 0
        %2024 = vperm.xlu0 %2023, %v2021
        %v2025 = vpop.permute.xlu0 %2024
        %v2027 = vmul.f32 %v2025, %v1658
        %v2028 = vadd.f32 %v2020, %v2027
        %2029 = vst [vmem:[#allocation2] sm:$0xff] %v2014
        %2030 = vst [vmem:[#allocation3] sm:$0xff] %v2028
        %p2031 = scmp.eq.s32.totalorder %s28, 1
        // Predicated region
        $region81: #{tpu_custom_call.1} parent=47 // pred_check
          %p2032 = pneg %p2031
        $region82: #{tpu_custom_call.1} parent=47 // pred_check_branch
          %2034 = sbr.rel (%p2032) target = $region84
        $region83: #{tpu_custom_call.1} parent=47 // pred_region
          %2035 = vst [vmem:[#allocation16] sm:$0xff] %v2014
          %2036 = vst [vmem:[#allocation17] sm:$0xff] %v2028
        $region84: #{tpu_custom_call.1} parent=47 // pred_fallthru
          _
        // Predicated region
        $region85: #{tpu_custom_call.1} parent=47 // pred_check
          %p2037 = pneg %p200
        $region86: #{tpu_custom_call.1} parent=47 // pred_check_branch
          %2039 = sbr.rel (%p2037) target = $region88
        $region87: #{tpu_custom_call.1} parent=47 // pred_region
          %s2041 = ssub.s32 128, 128
          %2042 = vsyncadd [#allocation6], %s2041
          %s2044 = sshll.u32 [#allocation16], 4
          %s2045 = int_to_ptr.vmem [resolvable:$true] %s2044
          %2047 = dma.vmem_to_hbm [thread:$0]  %s2045, 128, %s7, [#allocation6]
        $region88: #{tpu_custom_call.1} parent=47 // pred_fallthru
          _
        // Predicated region
        $region89: #{tpu_custom_call.1} parent=47 // pred_check
          %p2048 = pneg %p221
        $region90: #{tpu_custom_call.1} parent=47 // pred_check_branch
          %2050 = sbr.rel (%p2048) target = $region92
        $region91: #{tpu_custom_call.1} parent=47 // pred_region
          %s2052 = ssub.s32 128, 128
          %2053 = vsyncadd [#allocation18], %s2052
          %s2055 = sshll.u32 [#allocation17], 4
          %s2056 = int_to_ptr.vmem [resolvable:$true] %s2055
          %2058 = dma.vmem_to_hbm [thread:$0]  %s2056, 128, %s8, [#allocation18]
        $region92: #{tpu_custom_call.1} parent=47 // pred_fallthru
          _
        // Predicated region
        $region93: #{tpu_custom_call.1} parent=47 // pred_check
          %p2059 = pneg %p200
        $region94: #{tpu_custom_call.1} parent=47 // pred_check_branch
          %2061 = sbr.rel (%p2059) target = $region96
        $region95: #{tpu_custom_call.1} parent=47 // pred_region
          %2062 = dma.done [#allocation6], 128
        $region96: #{tpu_custom_call.1} parent=47 // pred_fallthru
          _
        // Predicated region
        $region97: #{tpu_custom_call.1} parent=47 // pred_check
          %p2063 = pneg %p221
        $region98: #{tpu_custom_call.1} parent=47 // pred_check_branch
          %2065 = sbr.rel (%p2063) target = $region100
        $region99: #{tpu_custom_call.1} parent=47 // pred_region
          %2066 = dma.done [#allocation18], 128
        $region100: #{tpu_custom_call.1} parent=47 // pred_fallthru
          _
      $region48: #{tpu_custom_call.1} parent=5 // pred_fallthru
        _
      %p2067 = scmp.le.s32.totalorder 2, %s23
      // Predicated region
      $region101: #{tpu_custom_call.1} parent=5 // pred_check
        %p2068 = pneg %p2067
      $region102: #{tpu_custom_call.1} parent=5 // pred_check_branch
        %2070 = sbr.rel (%p2068) target = $region104
      $region103: #{tpu_custom_call.1} parent=5 // pred_region
        %s2071 = ssub.s32 %s23, 2
      $region104: #{tpu_custom_call.1} parent=5 // pred_fallthru
        _
    $region6: #{tpu_custom_call.1} parent=1 // loop_footer
      %s27 = sadd.s32 1, %s23
    $region7: #{tpu_custom_call.1} parent=1 // loop_footer_branch
      %22 = sbr.rel target = $region3
    $region8: #{tpu_custom_call.1} parent=1 // loop_exit
      _
    %2072 = vsyncpa [#allocation5], 1
    %s2073 = scalar_lea.sflag [#allocation5], 1
    %2074 = vsyncpa %s2073, 1
    %2075 = vsyncpa [#allocation8], 1
    %s2076 = scalar_lea.sflag [#allocation8], 1
    %2077 = vsyncpa %s2076, 1
    %2078 = vsyncpa [#allocation11], 1
    %2079 = vsyncpa [#allocation14], 1
    %2080 = vsyncpa [#allocation6], 1
    %s2081 = scalar_lea.sflag [#allocation6], 1
    %2082 = vsyncpa %s2081, 1
    %2083 = vsyncpa [#allocation18], 1

</llo_original>
